<compile_context>
chip_gen: v6e
topology: v6e:2x2x1
jax: 0.10.0
libtpu: 0.0.40
codegen_flags: <defaults>
</compile_context>

<pallas_src>
import functools

import jax
import jax.numpy as jnp
from jax.scipy.linalg import block_diag
from jax.experimental import pallas as pl
from jax.experimental.pallas import tpu as pltpu


def gin_kernel(x_ref, adj_ref, pool_ref,
               w1a_ref, b1a_ref, w2a_ref, b2a_ref,
               w1b_ref, b1b_ref, w2b_ref, b2b_ref,
               wfc_ref, bfc_ref,
               out_ref, *, negative_slope):
    adjI = adj_ref[...]       # (BN, BN)  block-diagonal (I + A) for this block
    h = x_ref[...]            # (BN, Fin) node features for this block

    def gin_conv(h, w1, b1, w2, b2):
        # GINConv (eps=0): MLP((I + A) @ h) with
        # MLP = Linear -> LeakyReLU(0.2) -> BatchNorm1d -> Linear -> LeakyReLU(0.2).
        # The eval-mode BN affine is pre-folded into (w2, b2) in the wrapper.
        z = jnp.dot(adjI, h, preferred_element_type=jnp.float32)
        h1 = jnp.dot(z, w1[...], preferred_element_type=jnp.float32) + b1[...]
        h1 = jnp.maximum(h1, negative_slope * h1)            # LeakyReLU(0.2)
        h2 = jnp.dot(h1, w2[...], preferred_element_type=jnp.float32) + b2[...]
        return jnp.maximum(h2, negative_slope * h2)

    h = gin_conv(h, w1a_ref, b1a_ref, w2a_ref, b2a_ref)
    # F.dropout -> identity in eval-mode forward.
    h = gin_conv(h, w1b_ref, b1b_ref, w2b_ref, b2b_ref)

    # global_add_pool: pooling matrix already carries the node-validity mask.
    pooled = jnp.dot(pool_ref[...], h, preferred_element_type=jnp.float32)  # (Gb, H)
    # Final BatchNorm1d (eval) is pre-folded into (wfc, bfc).
    out_ref[...] = (jnp.dot(pooled, wfc_ref[...],
                            preferred_element_type=jnp.float32)
                    + bfc_ref[...]).astype(out_ref.dtype)


def fold_eval_params(params):
    """Fold eval-mode BN affines into the linear layer that follows them."""
    (w1a, b1a, s1a, t1a, w2a, b2a,
     w1b, b1b, s1b, t1b, w2b, b2b,
     sbn, tbn, wfc, bfc) = params

    def fold(scale, shift, w, b):
        # (h * scale + shift) @ w + b  ==  h @ (scale.T * w) + (shift @ w + b)
        return scale.reshape(-1, 1) * w, shift @ w + b

    w2a_f, b2a_f = fold(s1a, t1a, w2a, b2a)
    w2b_f, b2b_f = fold(s1b, t1b, w2b, b2b)
    wfc_f, bfc_f = fold(sbn, tbn, wfc, bfc)
    return (w1a, b1a, w2a_f, b2a_f,
            w1b, b1b, w2b_f, b2b_f,
            wfc_f, bfc_f)


def gin_forward(x_flat, adj_blocks, pool_blocks, params, *, negative_slope=0.2):
    NB, BN, _ = adj_blocks.shape
    Gb = pool_blocks.shape[1]
    G = NB * Gb
    Fin = x_flat.shape[1]

    kparams = fold_eval_params(params)
    latent = kparams[-1].shape[1]

    # GINConv (eps=0) aggregation is (I + A) @ h: fold the identity into the
    # propagation matrix once so each layer needs a single matmul (no add).
    adjI_blocks = adj_blocks + jnp.eye(BN, dtype=adj_blocks.dtype)[None]

    in_specs = [
        pl.BlockSpec((BN, Fin), lambda i: (i, 0)),            # node features (streamed)
        pl.BlockSpec((None, BN, BN), lambda i: (i, 0, 0)),    # per-block (I + A)
        pl.BlockSpec((None, Gb, BN), lambda i: (i, 0, 0)),    # per-block pooling rows
    ] + [
        # Weights / biases: constant block index -> DMA'd once, VMEM-resident
        # across all grid steps.
        pl.BlockSpec(p.shape, lambda i: (0, 0)) for p in kparams
    ]

    return pl.pallas_call(
        functools.partial(gin_kernel, negative_slope=negative_slope),
        out_shape=jax.ShapeDtypeStruct((G, latent), jnp.float32),
        grid=(NB,),
        in_specs=in_specs,
        out_specs=pl.BlockSpec((Gb, latent), lambda i: (i, 0)),
        compiler_params=pltpu.CompilerParams(
            dimension_semantics=("parallel",)),                # shards batch on v7x
    )(x_flat, adjI_blocks, pool_blocks, *kparams)


def reference_forward(x_flat, adj_full, pool_full, params, negative_slope=0.2):
    """Plain-JAX reference that mirrors the PyTorch module (unfolded)."""
    (w1a, b1a, s1a, t1a, w2a, b2a,
     w1b, b1b, s1b, t1b, w2b, b2b,
     sbn, tbn, wfc, bfc) = params
    hi = jax.lax.Precision.HIGHEST

    def conv(h, w1, b1, s1, t1, w2, b2):
        z = h + jnp.dot(adj_full, h, precision=hi)
        h1 = jnp.dot(z, w1, precision=hi) + b1
        h1 = jnp.maximum(h1, negative_slope * h1)
        h1 = h1 * s1 + t1
        h2 = jnp.dot(h1, w2, precision=hi) + b2
        return jnp.maximum(h2, negative_slope * h2)

    h = conv(x_flat, w1a, b1a, s1a, t1a, w2a, b2a)
    h = conv(h, w1b, b1b, s1b, t1b, w2b, b2b)
    pooled = jnp.dot(pool_full, h, precision=hi)
    pooled = pooled * sbn + tbn
    return jnp.dot(pooled, wfc, precision=hi) + bfc


if __name__ == "__main__":
    # Small, module-consistent shapes: 16 graphs x (<=8) nodes, input_dim=8,
    # hidden_dim=32, latent_dim=16, n_layers=2 GINConv layers.
    G, Nmax, Fin, H, latent = 16, 8, 8, 32, 16
    Gb = 8                      # graphs per grid step  -> BN = 64 node rows/step
    BN = Gb * Nmax
    NB = G // Gb
    Ntot = G * Nmax
    slope = 0.2
    bn_eps = 1e-5

    keys = iter(jax.random.split(jax.random.PRNGKey(0), 32))

    # ---- synthetic padded graphs -------------------------------------------
    num_nodes = jax.random.randint(next(keys), (G,), 4, Nmax + 1)
    node_mask = (jnp.arange(Nmax)[None, :] < num_nodes[:, None]).astype(jnp.float32)

    up = jnp.triu(jax.random.bernoulli(next(keys), 0.4, (G, Nmax, Nmax))
                  .astype(jnp.float32), k=1)
    adj_graphs = (up + jnp.swapaxes(up, 1, 2)) \
        * node_mask[:, :, None] * node_mask[:, None, :]

    x_graphs = jax.random.normal(next(keys), (G, Nmax, Fin), jnp.float32) \
        * node_mask[:, :, None]
    x_flat = x_graphs.reshape(Ntot, Fin)

    # Block-diagonal adjacency per grid block; pooling rows carry the node mask.
    adj_blocks = jnp.stack(
        [block_diag(*[adj_graphs[b * Gb + g] for g in range(Gb)]) for b in range(NB)])
    membership = jnp.kron(jnp.eye(G, dtype=jnp.float32), jnp.ones((1, Nmax), jnp.float32))
    pool_full = membership * node_mask.reshape(1, Ntot)
    pool_blocks = jnp.stack(
        [pool_full[b * Gb:(b + 1) * Gb, b * BN:(b + 1) * BN] for b in range(NB)])

    # ---- parameters (deterministic; eval BatchNorm as scale/shift) ----------
    def linear(kw, kb, din, dout):
        w = jax.random.normal(kw, (din, dout), jnp.float32) * 0.2
        b = jax.random.normal(kb, (1, dout), jnp.float32) * 0.1
        return w, b

    def bn_affine(kg, kb2, km, kv, d):
        gamma = 1.0 + 0.1 * jax.random.normal(kg, (1, d), jnp.float32)
        beta = 0.1 * jax.random.normal(kb2, (1, d), jnp.float32)
        mean = 0.1 * jax.random.normal(km, (1, d), jnp.float32)
        var = jax.random.uniform(kv, (1, d), jnp.float32, 0.5, 1.5)
        s = gamma / jnp.sqrt(var + bn_eps)
        return s, beta - mean * s

    w1a, b1a = linear(next(keys), next(keys), Fin, H)
    s1a, t1a = bn_affine(next(keys), next(keys), next(keys), next(keys), H)
    w2a, b2a = linear(next(keys), next(keys), H, H)

    w1b, b1b = linear(next(keys), next(keys), H, H)
    s1b, t1b = bn_affine(next(keys), next(keys), next(keys), next(keys), H)
    w2b, b2b = linear(next(keys), next(keys), H, H)

    sbn, tbn = bn_affine(next(keys), next(keys), next(keys), next(keys), H)
    wfc, bfc = linear(next(keys), next(keys), H, latent)

    params = (w1a, b1a, s1a, t1a, w2a, b2a,
              w1b, b1b, s1b, t1b, w2b, b2b,
              sbn, tbn, wfc, bfc)

    # ---- run kernel and check against plain-JAX reference -------------------
    out = gin_forward(x_flat, adj_blocks, pool_blocks, params, negative_slope=slope)
    out = jax.block_until_ready(out)

    adj_full = block_diag(*[adj_graphs[g] for g in range(G)])
    ref = reference_forward(x_flat, adj_full, pool_full, params, negative_slope=slope)

    assert out.shape == (G, latent)
    assert jnp.allclose(out, ref, atol=2e-3, rtol=2e-3), "kernel/reference mismatch"

    print("KERNEL_OK")
</pallas_src>

<mosaic_0001>
module attributes {stable_mosaic.version = 11 : i64} {
  func.func @gin_kernel(%arg0: i32, %arg1: memref<64x8xf32, #tpu.memory_space<vmem>>, %arg2: memref<1x64x64xf32, #tpu.memory_space<vmem>>, %arg3: memref<1x8x64xf32, #tpu.memory_space<vmem>>, %arg4: memref<8x32xf32, #tpu.memory_space<vmem>>, %arg5: memref<1x32xf32, #tpu.memory_space<vmem>>, %arg6: memref<32x32xf32, #tpu.memory_space<vmem>>, %arg7: memref<1x32xf32, #tpu.memory_space<vmem>>, %arg8: memref<32x32xf32, #tpu.memory_space<vmem>>, %arg9: memref<1x32xf32, #tpu.memory_space<vmem>>, %arg10: memref<32x32xf32, #tpu.memory_space<vmem>>, %arg11: memref<1x32xf32, #tpu.memory_space<vmem>>, %arg12: memref<32x16xf32, #tpu.memory_space<vmem>>, %arg13: memref<1x16xf32, #tpu.memory_space<vmem>>, %arg14: memref<8x16xf32, #tpu.memory_space<vmem>>) attributes {dimension_semantics = [#tpu.dimension_semantics<parallel>], iteration_bounds = array<i64: 2>, scalar_prefetch = 0 : i64, scratch_operands = 0 : i64, tpu.core_type = #tpu.core_type<tc>, window_params = [{transform_indices = @transform_0, window_bounds = array<i64: 64, 8>}, {transform_indices = @transform_1, window_bounds = array<i64: 1, 64, 64>}, {transform_indices = @transform_2, window_bounds = array<i64: 1, 8, 64>}, {pipeline_mode = #tpu.pipeline_mode<synchronous>, transform_indices = @transform_3, window_bounds = array<i64: 8, 32>}, {pipeline_mode = #tpu.pipeline_mode<synchronous>, transform_indices = @transform_4, window_bounds = array<i64: 1, 32>}, {pipeline_mode = #tpu.pipeline_mode<synchronous>, transform_indices = @transform_5, window_bounds = array<i64: 32, 32>}, {pipeline_mode = #tpu.pipeline_mode<synchronous>, transform_indices = @transform_6, window_bounds = array<i64: 1, 32>}, {pipeline_mode = #tpu.pipeline_mode<synchronous>, transform_indices = @transform_7, window_bounds = array<i64: 32, 32>}, {pipeline_mode = #tpu.pipeline_mode<synchronous>, transform_indices = @transform_8, window_bounds = array<i64: 1, 32>}, {pipeline_mode = #tpu.pipeline_mode<synchronous>, transform_indices = @transform_9, window_bounds = array<i64: 32, 32>}, {pipeline_mode = #tpu.pipeline_mode<synchronous>, transform_indices = @transform_10, window_bounds = array<i64: 1, 32>}, {pipeline_mode = #tpu.pipeline_mode<synchronous>, transform_indices = @transform_11, window_bounds = array<i64: 32, 16>}, {pipeline_mode = #tpu.pipeline_mode<synchronous>, transform_indices = @transform_12, window_bounds = array<i64: 1, 16>}, {transform_indices = @transform_13, window_bounds = array<i64: 8, 16>}]} {
    %c0 = arith.constant 0 : index
    %c0_0 = arith.constant 0 : index
    %c0_1 = arith.constant 0 : index
    %0 = vector.load %arg2[%c0, %c0_0, %c0_1] : memref<1x64x64xf32, #tpu.memory_space<vmem>>, vector<1x64x64xf32>
    %1 = vector.shape_cast %0 : vector<1x64x64xf32> to vector<64x64xf32>
    %c0_2 = arith.constant 0 : index
    %c0_3 = arith.constant 0 : index
    %2 = vector.load %arg1[%c0_2, %c0_3] : memref<64x8xf32, #tpu.memory_space<vmem>>, vector<64x8xf32>
    %cst = arith.constant dense<0.000000e+00> : vector<64x8xf32>
    %3 = tpu.matmul %1, %2, %cst {dimension_numbers = #tpu.dot_dimension_numbers<[1], [0], [0], [1], [0, 0, 1, 1], [], []>} : vector<64x64xf32>, vector<64x8xf32>, vector<64x8xf32> -> vector<64x8xf32>
    %c0_4 = arith.constant 0 : index
    %c0_5 = arith.constant 0 : index
    %4 = vector.load %arg4[%c0_4, %c0_5] : memref<8x32xf32, #tpu.memory_space<vmem>>, vector<8x32xf32>
    %cst_6 = arith.constant dense<0.000000e+00> : vector<64x32xf32>
    %5 = tpu.matmul %3, %4, %cst_6 {dimension_numbers = #tpu.dot_dimension_numbers<[1], [0], [0], [1], [0, 0, 1, 1], [], []>} : vector<64x8xf32>, vector<8x32xf32>, vector<64x32xf32> -> vector<64x32xf32>
    %c0_7 = arith.constant 0 : index
    %c0_8 = arith.constant 0 : index
    %6 = vector.load %arg5[%c0_7, %c0_8] : memref<1x32xf32, #tpu.memory_space<vmem>>, vector<1x32xf32>
    %7 = vector.broadcast %6 : vector<1x32xf32> to vector<64x32xf32>
    %8 = arith.addf %5, %7 : vector<64x32xf32>
    %cst_9 = arith.constant 2.000000e-01 : f32
    %9 = vector.broadcast %cst_9 : f32 to vector<64x32xf32>
    %10 = arith.mulf %9, %8 : vector<64x32xf32>
    %11 = arith.maximumf %8, %10 : vector<64x32xf32>
    %c0_10 = arith.constant 0 : index
    %c0_11 = arith.constant 0 : index
    %12 = vector.load %arg6[%c0_10, %c0_11] : memref<32x32xf32, #tpu.memory_space<vmem>>, vector<32x32xf32>
    %cst_12 = arith.constant dense<0.000000e+00> : vector<64x32xf32>
    %13 = tpu.matmul %11, %12, %cst_12 {dimension_numbers = #tpu.dot_dimension_numbers<[1], [0], [0], [1], [0, 0, 1, 1], [], []>} : vector<64x32xf32>, vector<32x32xf32>, vector<64x32xf32> -> vector<64x32xf32>
    %c0_13 = arith.constant 0 : index
    %c0_14 = arith.constant 0 : index
    %14 = vector.load %arg7[%c0_13, %c0_14] : memref<1x32xf32, #tpu.memory_space<vmem>>, vector<1x32xf32>
    %15 = vector.broadcast %14 : vector<1x32xf32> to vector<64x32xf32>
    %16 = arith.addf %13, %15 : vector<64x32xf32>
    %cst_15 = arith.constant 2.000000e-01 : f32
    %17 = vector.broadcast %cst_15 : f32 to vector<64x32xf32>
    %18 = arith.mulf %17, %16 : vector<64x32xf32>
    %19 = arith.maximumf %16, %18 : vector<64x32xf32>
    %cst_16 = arith.constant dense<0.000000e+00> : vector<64x32xf32>
    %20 = tpu.matmul %1, %19, %cst_16 {dimension_numbers = #tpu.dot_dimension_numbers<[1], [0], [0], [1], [0, 0, 1, 1], [], []>} : vector<64x64xf32>, vector<64x32xf32>, vector<64x32xf32> -> vector<64x32xf32>
    %c0_17 = arith.constant 0 : index
    %c0_18 = arith.constant 0 : index
    %21 = vector.load %arg8[%c0_17, %c0_18] : memref<32x32xf32, #tpu.memory_space<vmem>>, vector<32x32xf32>
    %cst_19 = arith.constant dense<0.000000e+00> : vector<64x32xf32>
    %22 = tpu.matmul %20, %21, %cst_19 {dimension_numbers = #tpu.dot_dimension_numbers<[1], [0], [0], [1], [0, 0, 1, 1], [], []>} : vector<64x32xf32>, vector<32x32xf32>, vector<64x32xf32> -> vector<64x32xf32>
    %c0_20 = arith.constant 0 : index
    %c0_21 = arith.constant 0 : index
    %23 = vector.load %arg9[%c0_20, %c0_21] : memref<1x32xf32, #tpu.memory_space<vmem>>, vector<1x32xf32>
    %24 = vector.broadcast %23 : vector<1x32xf32> to vector<64x32xf32>
    %25 = arith.addf %22, %24 : vector<64x32xf32>
    %cst_22 = arith.constant 2.000000e-01 : f32
    %26 = vector.broadcast %cst_22 : f32 to vector<64x32xf32>
    %27 = arith.mulf %26, %25 : vector<64x32xf32>
    %28 = arith.maximumf %25, %27 : vector<64x32xf32>
    %c0_23 = arith.constant 0 : index
    %c0_24 = arith.constant 0 : index
    %29 = vector.load %arg10[%c0_23, %c0_24] : memref<32x32xf32, #tpu.memory_space<vmem>>, vector<32x32xf32>
    %cst_25 = arith.constant dense<0.000000e+00> : vector<64x32xf32>
    %30 = tpu.matmul %28, %29, %cst_25 {dimension_numbers = #tpu.dot_dimension_numbers<[1], [0], [0], [1], [0, 0, 1, 1], [], []>} : vector<64x32xf32>, vector<32x32xf32>, vector<64x32xf32> -> vector<64x32xf32>
    %c0_26 = arith.constant 0 : index
    %c0_27 = arith.constant 0 : index
    %31 = vector.load %arg11[%c0_26, %c0_27] : memref<1x32xf32, #tpu.memory_space<vmem>>, vector<1x32xf32>
    %32 = vector.broadcast %31 : vector<1x32xf32> to vector<64x32xf32>
    %33 = arith.addf %30, %32 : vector<64x32xf32>
    %cst_28 = arith.constant 2.000000e-01 : f32
    %34 = vector.broadcast %cst_28 : f32 to vector<64x32xf32>
    %35 = arith.mulf %34, %33 : vector<64x32xf32>
    %36 = arith.maximumf %33, %35 : vector<64x32xf32>
    %c0_29 = arith.constant 0 : index
    %c0_30 = arith.constant 0 : index
    %c0_31 = arith.constant 0 : index
    %37 = vector.load %arg3[%c0_29, %c0_30, %c0_31] : memref<1x8x64xf32, #tpu.memory_space<vmem>>, vector<1x8x64xf32>
    %38 = vector.shape_cast %37 : vector<1x8x64xf32> to vector<8x64xf32>
    %cst_32 = arith.constant dense<0.000000e+00> : vector<8x32xf32>
    %39 = tpu.matmul %38, %36, %cst_32 {dimension_numbers = #tpu.dot_dimension_numbers<[1], [0], [0], [1], [0, 0, 1, 1], [], []>} : vector<8x64xf32>, vector<64x32xf32>, vector<8x32xf32> -> vector<8x32xf32>
    %c0_33 = arith.constant 0 : index
    %c0_34 = arith.constant 0 : index
    %40 = vector.load %arg12[%c0_33, %c0_34] : memref<32x16xf32, #tpu.memory_space<vmem>>, vector<32x16xf32>
    %cst_35 = arith.constant dense<0.000000e+00> : vector<8x16xf32>
    %41 = tpu.matmul %39, %40, %cst_35 {dimension_numbers = #tpu.dot_dimension_numbers<[1], [0], [0], [1], [0, 0, 1, 1], [], []>} : vector<8x32xf32>, vector<32x16xf32>, vector<8x16xf32> -> vector<8x16xf32>
    %c0_36 = arith.constant 0 : index
    %c0_37 = arith.constant 0 : index
    %42 = vector.load %arg13[%c0_36, %c0_37] : memref<1x16xf32, #tpu.memory_space<vmem>>, vector<1x16xf32>
    %43 = vector.broadcast %42 : vector<1x16xf32> to vector<8x16xf32>
    %44 = arith.addf %41, %43 : vector<8x16xf32>
    %c0_38 = arith.constant 0 : index
    %c0_39 = arith.constant 0 : index
    %45 = vector.load %arg14[%c0_38, %c0_39] : memref<8x16xf32, #tpu.memory_space<vmem>>, vector<8x16xf32>
    tpu.vector_store %arg14[%c0_38, %c0_39], %44 {strides = array<i32>} : memref<8x16xf32, #tpu.memory_space<vmem>>, vector<8x16xf32>,
    return
  }
  func.func @transform_0(%arg0: i32) -> (i32, i32) {
    %c0_i32 = arith.constant 0 : i32
    %c0_i32_0 = arith.constant 0 : i32
    return %arg0, %c0_i32 : i32, i32
  }
  func.func @transform_1(%arg0: i32) -> (i32, i32, i32) {
    %c0_i32 = arith.constant 0 : i32
    %c0_i32_0 = arith.constant 0 : i32
    %c0_i32_1 = arith.constant 0 : i32
    return %arg0, %c0_i32, %c0_i32_0 : i32, i32, i32
  }
  func.func @transform_2(%arg0: i32) -> (i32, i32, i32) {
    %c0_i32 = arith.constant 0 : i32
    %c0_i32_0 = arith.constant 0 : i32
    %c0_i32_1 = arith.constant 0 : i32
    return %arg0, %c0_i32, %c0_i32_0 : i32, i32, i32
  }
  func.func @transform_3(%arg0: i32) -> (i32, i32) {
    %c0_i32 = arith.constant 0 : i32
    %c0_i32_0 = arith.constant 0 : i32
    %c0_i32_1 = arith.constant 0 : i32
    return %c0_i32, %c0_i32_0 : i32, i32
  }
  func.func @transform_4(%arg0: i32) -> (i32, i32) {
    %c0_i32 = arith.constant 0 : i32
    %c0_i32_0 = arith.constant 0 : i32
    %c0_i32_1 = arith.constant 0 : i32
    return %c0_i32, %c0_i32_0 : i32, i32
  }
  func.func @transform_5(%arg0: i32) -> (i32, i32) {
    %c0_i32 = arith.constant 0 : i32
    %c0_i32_0 = arith.constant 0 : i32
    %c0_i32_1 = arith.constant 0 : i32
    return %c0_i32, %c0_i32_0 : i32, i32
  }
  func.func @transform_6(%arg0: i32) -> (i32, i32) {
    %c0_i32 = arith.constant 0 : i32
    %c0_i32_0 = arith.constant 0 : i32
    %c0_i32_1 = arith.constant 0 : i32
    return %c0_i32, %c0_i32_0 : i32, i32
  }
  func.func @transform_7(%arg0: i32) -> (i32, i32) {
    %c0_i32 = arith.constant 0 : i32
    %c0_i32_0 = arith.constant 0 : i32
    %c0_i32_1 = arith.constant 0 : i32
    return %c0_i32, %c0_i32_0 : i32, i32
  }
  func.func @transform_8(%arg0: i32) -> (i32, i32) {
    %c0_i32 = arith.constant 0 : i32
    %c0_i32_0 = arith.constant 0 : i32
    %c0_i32_1 = arith.constant 0 : i32
    return %c0_i32, %c0_i32_0 : i32, i32
  }
  func.func @transform_9(%arg0: i32) -> (i32, i32) {
    %c0_i32 = arith.constant 0 : i32
    %c0_i32_0 = arith.constant 0 : i32
    %c0_i32_1 = arith.constant 0 : i32
    return %c0_i32, %c0_i32_0 : i32, i32
  }
  func.func @transform_10(%arg0: i32) -> (i32, i32) {
    %c0_i32 = arith.constant 0 : i32
    %c0_i32_0 = arith.constant 0 : i32
    %c0_i32_1 = arith.constant 0 : i32
    return %c0_i32, %c0_i32_0 : i32, i32
  }
  func.func @transform_11(%arg0: i32) -> (i32, i32) {
    %c0_i32 = arith.constant 0 : i32
    %c0_i32_0 = arith.constant 0 : i32
    %c0_i32_1 = arith.constant 0 : i32
    return %c0_i32, %c0_i32_0 : i32, i32
  }
  func.func @transform_12(%arg0: i32) -> (i32, i32) {
    %c0_i32 = arith.constant 0 : i32
    %c0_i32_0 = arith.constant 0 : i32
    %c0_i32_1 = arith.constant 0 : i32
    return %c0_i32, %c0_i32_0 : i32, i32
  }
  func.func @transform_13(%arg0: i32) -> (i32, i32) {
    %c0_i32 = arith.constant 0 : i32
    %c0_i32_0 = arith.constant 0 : i32
    return %arg0, %c0_i32 : i32, i32
  }
}

</mosaic_0001>

<llo_original>
// kernel: tpu_custom_call.1
$region0: #{tpu_custom_call.1}
  #allocation0 [shape = 'u32[]', space=smem, size = 0x4, offset = 0x4, fixed_abs, tag = 'smem constant byte address 0x4 - core index']
  #allocation1 [shape = 'u32[144,128]{1,0:T(1,128)}', space=vmem, size = 0x12000, scoped, tag = 'internal scratch']
  %s0 = inlined_call_operand.vmem [shape: f32[128,8], index: 0, kind: input, shape index: {}]
  %s1 = inlined_call_operand.vmem [shape: f32[2,64,64], index: 1, kind: input, shape index: {}]
  %s2 = inlined_call_operand.hbm [shape: f32[2,8,64], index: 2, kind: input, shape index: {}]
  %s3 = inlined_call_operand.hbm [shape: f32[8,32], index: 3, kind: input, shape index: {}]
  %s4 = inlined_call_operand.vmem [shape: f32[1,32], index: 4, kind: input, shape index: {}]
  %s5 = inlined_call_operand.vmem [shape: f32[32,32], index: 5, kind: input, shape index: {}]
  %s6 = inlined_call_operand.vmem [shape: f32[1,32], index: 6, kind: input, shape index: {}]
  %s7 = inlined_call_operand.vmem [shape: f32[32,32], index: 7, kind: input, shape index: {}]
  %s8 = inlined_call_operand.vmem [shape: f32[1,32], index: 8, kind: input, shape index: {}]
  %s9 = inlined_call_operand.hbm [shape: f32[32,32], index: 9, kind: input, shape index: {}]
  %s10 = inlined_call_operand.vmem [shape: f32[1,32], index: 10, kind: input, shape index: {}]
  %s11 = inlined_call_operand.vmem [shape: f32[32,16], index: 11, kind: input, shape index: {}]
  %s12 = inlined_call_operand.vmem [shape: f32[1,16], index: 12, kind: input, shape index: {}]
  %s13 = inlined_call_operand.hbm [shape: f32[16,16], index: 13, kind: output, shape index: {}]
  %s14 = sld [smem:[#allocation0]]
  $region97: #{tpu_custom_call.1} parent=0
    _
  %s16 = ssub.s32 1, %s14
  %s17 = scalar_select 0, %s16, %s14
  $region1: #{tpu_custom_call.1} parent=0
    #allocation2 [shape = 'u8[8192]{0}', space=vmem, size = 0x2000, scoped, tag = 'input window, operand 2']
    #allocation3 [shape = 's32[2]{0}', space=sflag, size = 0x8, scoped, tag = 'scoped memory for tpu_custom_call.1']
    #allocation4 [shape = 's32[2]{0}', space=sflag, size = 0x8, scoped, tag = 'scoped memory for tpu_custom_call.1']
    #allocation5 [shape = 'u8[4096]{0}', space=vmem, size = 0x1000, scoped, tag = 'input window, operand 3, single buffered']
    #allocation6 [shape = 's32[1]{0}', space=sflag, size = 0x4, scoped, tag = 'scoped memory for tpu_custom_call.1']
    #allocation7 [shape = 'u8[16384]{0}', space=vmem, size = 0x4000, scoped, tag = 'input window, operand 9, single buffered']
    #allocation8 [shape = 'u8[8192]{0}', space=vmem, size = 0x2000, scoped, tag = 'output window, operand 0']
    %18 = vsyncpa [#allocation3], 0
    %s19 = scalar_lea.sflag [#allocation3], 1
    %20 = vsyncpa %s19, 0
    %21 = vsyncpa [#allocation6], 0
    %22 = vsyncpa [#allocation4], 0
    %s23 = scalar_lea.sflag [#allocation4], 1
    %24 = vsyncpa %s23, 0
    loop: start=0, step=1, limit=4
    $region2: #{tpu_custom_call.1} parent=1 // loop_pre_header
      _
    $region3: #{tpu_custom_call.1} parent=1 // loop_header
      %s26 = sphi 0, %s30
      %p27 = scmp.ge.s32.totalorder %s26, 4
      %s36 = sphi 0, %s38
      %s39 = sphi 0, %s36
      %s40 = sphi 0, %s39
      %s56 = sphi 0, %s40
      %s62 = sphi 0, %s64
      %s65 = sphi 0, %s62
      %s66 = sphi 0, %s65
      %s82 = sphi 0, %s66
      %s88 = sphi 0, %s90
      %s91 = sphi 0, %s88
      %s92 = sphi 0, %s91
      %s108 = sphi 0, %s92
      %s112 = sphi 0, %s112
      %s114 = sphi 0, %s112
      %s115 = sphi 0, %s114
      %s129 = sphi 0, %s115
      %s133 = sphi 0, %s133
      %s135 = sphi 0, %s133
      %s136 = sphi 0, %s135
      %s150 = sphi 0, %s136
      %s154 = sphi 0, %s154
      %s156 = sphi 0, %s154
      %s157 = sphi 0, %s156
      %s171 = sphi 0, %s157
      %s175 = sphi 0, %s175
      %s177 = sphi 0, %s175
      %s178 = sphi 0, %s177
      %s192 = sphi 0, %s178
      %s196 = sphi 0, %s196
      %s198 = sphi 0, %s196
      %s199 = sphi 0, %s198
      %s213 = sphi 0, %s199
      %s217 = sphi 0, %s217
      %s219 = sphi 0, %s217
      %s220 = sphi 0, %s219
      %s234 = sphi 0, %s220
      %s238 = sphi 0, %s238
      %s240 = sphi 0, %s238
      %s241 = sphi 0, %s240
      %s255 = sphi 0, %s241
      %s259 = sphi 0, %s259
      %s261 = sphi 0, %s259
      %s262 = sphi 0, %s261
      %s276 = sphi 0, %s262
      %s280 = sphi 0, %s280
      %s282 = sphi 0, %s280
      %s283 = sphi 0, %s282
      %s297 = sphi 0, %s283
      %s301 = sphi 0, %s301
      %s303 = sphi 0, %s301
      %s304 = sphi 0, %s303
      %s318 = sphi 0, %s304
      %s324 = sphi 0, %s326
      %s327 = sphi 0, %s324
      %s328 = sphi 0, %s327
      %s344 = sphi 0, %s328
    $region4: #{tpu_custom_call.1} parent=1 // loop_header_branch
      %29 = sbr.rel (%p27) target = $region8
    $region5: #{tpu_custom_call.1} parent=1 // loop_body
      %s31 = ssub.s32 %s26, 1
      %s32 = ssub.s32 %s26, 2
      %s33 = sadd.s32 %s26, 1
      %s34 = ssub.s32 %s26, %s33
      %p35 = scmp.eq.s32.totalorder %s34, 0
      %s37 = sadd.s32 %s36, 1
      %s38 = scalar_select %p35, %s36, %s37
      %p41 = pneg %p35
      %p42 = scmp.eq.s32.totalorder %s26, 1
      %p43 = por %p41, %p42
      %p44 = scmp.ne.s32.totalorder %s36, %s39
      %p45 = scmp.eq.s32.totalorder %s26, 0
      %p46 = por %p44, %p45
      %p47 = scmp.ne.s32.totalorder %s36, %s39
      %p48 = scmp.eq.s32.totalorder %s31, 1
      %p49 = por %p47, %p48
      %p50 = scmp.ne.s32.totalorder %s39, %s40
      %p51 = scmp.eq.s32.totalorder %s31, 0
      %p52 = por %p50, %p51
      %p53 = scmp.ne.s32.totalorder %s39, %s40
      %p54 = scmp.eq.s32.totalorder %s32, 1
      %p55 = por %p53, %p54
      %p57 = scmp.ne.s32.totalorder %s40, %s56
      %p58 = scmp.eq.s32.totalorder %s32, 0
      %p59 = por %p57, %p58
      %s60 = ssub.s32 %s26, %s33
      %p61 = scmp.eq.s32.totalorder %s60, 0
      %s63 = sadd.s32 %s62, 1
      %s64 = scalar_select %p61, %s62, %s63
      %p67 = pneg %p61
      %p68 = scmp.eq.s32.totalorder %s26, 1
      %p69 = por %p67, %p68
      %p70 = scmp.ne.s32.totalorder %s62, %s65
      %p71 = scmp.eq.s32.totalorder %s26, 0
      %p72 = por %p70, %p71
      %p73 = scmp.ne.s32.totalorder %s62, %s65
      %p74 = scmp.eq.s32.totalorder %s31, 1
      %p75 = por %p73, %p74
      %p76 = scmp.ne.s32.totalorder %s65, %s66
      %p77 = scmp.eq.s32.totalorder %s31, 0
      %p78 = por %p76, %p77
      %p79 = scmp.ne.s32.totalorder %s65, %s66
      %p80 = scmp.eq.s32.totalorder %s32, 1
      %p81 = por %p79, %p80
      %p83 = scmp.ne.s32.totalorder %s66, %s82
      %p84 = scmp.eq.s32.totalorder %s32, 0
      %p85 = por %p83, %p84
      %s86 = ssub.s32 %s26, %s33
      %p87 = scmp.eq.s32.totalorder %s86, 0
      %s89 = sadd.s32 %s88, 1
      %s90 = scalar_select %p87, %s88, %s89
      %p93 = pneg %p87
      %p94 = scmp.eq.s32.totalorder %s26, 1
      %p95 = por %p93, %p94
      %p96 = scmp.ne.s32.totalorder %s88, %s91
      %p97 = scmp.eq.s32.totalorder %s26, 0
      %p98 = por %p96, %p97
      %p99 = scmp.ne.s32.totalorder %s88, %s91
      %p100 = scmp.eq.s32.totalorder %s31, 1
      %p101 = por %p99, %p100
      %p102 = scmp.ne.s32.totalorder %s91, %s92
      %p103 = scmp.eq.s32.totalorder %s31, 0
      %p104 = por %p102, %p103
      %p105 = scmp.ne.s32.totalorder %s91, %s92
      %p106 = scmp.eq.s32.totalorder %s32, 1
      %p107 = por %p105, %p106
      %p109 = scmp.ne.s32.totalorder %s92, %s108
      %p110 = scmp.eq.s32.totalorder %s32, 0
      %p111 = por %p109, %p110
      %s113 = sadd.s32 %s112, 1
      %p116 = scmp.eq.s32.totalorder %s26, 1
      %p117 = scmp.ne.s32.totalorder %s112, %s114
      %p118 = scmp.eq.s32.totalorder %s26, 0
      %p119 = por %p117, %p118
      %p120 = scmp.ne.s32.totalorder %s112, %s114
      %p121 = scmp.eq.s32.totalorder %s31, 1
      %p122 = por %p120, %p121
      %p123 = scmp.ne.s32.totalorder %s114, %s115
      %p124 = scmp.eq.s32.totalorder %s31, 0
      %p125 = por %p123, %p124
      %p126 = scmp.ne.s32.totalorder %s114, %s115
      %p127 = scmp.eq.s32.totalorder %s32, 1
      %p128 = por %p126, %p127
      %p130 = scmp.ne.s32.totalorder %s115, %s129
      %p131 = scmp.eq.s32.totalorder %s32, 0
      %p132 = por %p130, %p131
      %s134 = sadd.s32 %s133, 1
      %p137 = scmp.eq.s32.totalorder %s26, 1
      %p138 = scmp.ne.s32.totalorder %s133, %s135
      %p139 = scmp.eq.s32.totalorder %s26, 0
      %p140 = por %p138, %p139
      %p141 = scmp.ne.s32.totalorder %s133, %s135
      %p142 = scmp.eq.s32.totalorder %s31, 1
      %p143 = por %p141, %p142
      %p144 = scmp.ne.s32.totalorder %s135, %s136
      %p145 = scmp.eq.s32.totalorder %s31, 0
      %p146 = por %p144, %p145
      %p147 = scmp.ne.s32.totalorder %s135, %s136
      %p148 = scmp.eq.s32.totalorder %s32, 1
      %p149 = por %p147, %p148
      %p151 = scmp.ne.s32.totalorder %s136, %s150
      %p152 = scmp.eq.s32.totalorder %s32, 0
      %p153 = por %p151, %p152
      %s155 = sadd.s32 %s154, 1
      %p158 = scmp.eq.s32.totalorder %s26, 1
      %p159 = scmp.ne.s32.totalorder %s154, %s156
      %p160 = scmp.eq.s32.totalorder %s26, 0
      %p161 = por %p159, %p160
      %p162 = scmp.ne.s32.totalorder %s154, %s156
      %p163 = scmp.eq.s32.totalorder %s31, 1
      %p164 = por %p162, %p163
      %p165 = scmp.ne.s32.totalorder %s156, %s157
      %p166 = scmp.eq.s32.totalorder %s31, 0
      %p167 = por %p165, %p166
      %p168 = scmp.ne.s32.totalorder %s156, %s157
      %p169 = scmp.eq.s32.totalorder %s32, 1
      %p170 = por %p168, %p169
      %p172 = scmp.ne.s32.totalorder %s157, %s171
      %p173 = scmp.eq.s32.totalorder %s32, 0
      %p174 = por %p172, %p173
      %s176 = sadd.s32 %s175, 1
      %p179 = scmp.eq.s32.totalorder %s26, 1
      %p180 = scmp.ne.s32.totalorder %s175, %s177
      %p181 = scmp.eq.s32.totalorder %s26, 0
      %p182 = por %p180, %p181
      %p183 = scmp.ne.s32.totalorder %s175, %s177
      %p184 = scmp.eq.s32.totalorder %s31, 1
      %p185 = por %p183, %p184
      %p186 = scmp.ne.s32.totalorder %s177, %s178
      %p187 = scmp.eq.s32.totalorder %s31, 0
      %p188 = por %p186, %p187
      %p189 = scmp.ne.s32.totalorder %s177, %s178
      %p190 = scmp.eq.s32.totalorder %s32, 1
      %p191 = por %p189, %p190
      %p193 = scmp.ne.s32.totalorder %s178, %s192
      %p194 = scmp.eq.s32.totalorder %s32, 0
      %p195 = por %p193, %p194
      %s197 = sadd.s32 %s196, 1
      %p200 = scmp.eq.s32.totalorder %s26, 1
      %p201 = scmp.ne.s32.totalorder %s196, %s198
      %p202 = scmp.eq.s32.totalorder %s26, 0
      %p203 = por %p201, %p202
      %p204 = scmp.ne.s32.totalorder %s196, %s198
      %p205 = scmp.eq.s32.totalorder %s31, 1
      %p206 = por %p204, %p205
      %p207 = scmp.ne.s32.totalorder %s198, %s199
      %p208 = scmp.eq.s32.totalorder %s31, 0
      %p209 = por %p207, %p208
      %p210 = scmp.ne.s32.totalorder %s198, %s199
      %p211 = scmp.eq.s32.totalorder %s32, 1
      %p212 = por %p210, %p211
      %p214 = scmp.ne.s32.totalorder %s199, %s213
      %p215 = scmp.eq.s32.totalorder %s32, 0
      %p216 = por %p214, %p215
      %s218 = sadd.s32 %s217, 1
      %p221 = scmp.eq.s32.totalorder %s26, 1
      %p222 = scmp.ne.s32.totalorder %s217, %s219
      %p223 = scmp.eq.s32.totalorder %s26, 0
      %p224 = por %p222, %p223
      %p225 = scmp.ne.s32.totalorder %s217, %s219
      %p226 = scmp.eq.s32.totalorder %s31, 1
      %p227 = por %p225, %p226
      %p228 = scmp.ne.s32.totalorder %s219, %s220
      %p229 = scmp.eq.s32.totalorder %s31, 0
      %p230 = por %p228, %p229
      %p231 = scmp.ne.s32.totalorder %s219, %s220
      %p232 = scmp.eq.s32.totalorder %s32, 1
      %p233 = por %p231, %p232
      %p235 = scmp.ne.s32.totalorder %s220, %s234
      %p236 = scmp.eq.s32.totalorder %s32, 0
      %p237 = por %p235, %p236
      %s239 = sadd.s32 %s238, 1
      %p242 = scmp.eq.s32.totalorder %s26, 1
      %p243 = scmp.ne.s32.totalorder %s238, %s240
      %p244 = scmp.eq.s32.totalorder %s26, 0
      %p245 = por %p243, %p244
      %p246 = scmp.ne.s32.totalorder %s238, %s240
      %p247 = scmp.eq.s32.totalorder %s31, 1
      %p248 = por %p246, %p247
      %p249 = scmp.ne.s32.totalorder %s240, %s241
      %p250 = scmp.eq.s32.totalorder %s31, 0
      %p251 = por %p249, %p250
      %p252 = scmp.ne.s32.totalorder %s240, %s241
      %p253 = scmp.eq.s32.totalorder %s32, 1
      %p254 = por %p252, %p253
      %p256 = scmp.ne.s32.totalorder %s241, %s255
      %p257 = scmp.eq.s32.totalorder %s32, 0
      %p258 = por %p256, %p257
      %s260 = sadd.s32 %s259, 1
      %p263 = scmp.eq.s32.totalorder %s26, 1
      %p264 = scmp.ne.s32.totalorder %s259, %s261
      %p265 = scmp.eq.s32.totalorder %s26, 0
      %p266 = por %p264, %p265
      %p267 = scmp.ne.s32.totalorder %s259, %s261
      %p268 = scmp.eq.s32.totalorder %s31, 1
      %p269 = por %p267, %p268
      %p270 = scmp.ne.s32.totalorder %s261, %s262
      %p271 = scmp.eq.s32.totalorder %s31, 0
      %p272 = por %p270, %p271
      %p273 = scmp.ne.s32.totalorder %s261, %s262
      %p274 = scmp.eq.s32.totalorder %s32, 1
      %p275 = por %p273, %p274
      %p277 = scmp.ne.s32.totalorder %s262, %s276
      %p278 = scmp.eq.s32.totalorder %s32, 0
      %p279 = por %p277, %p278
      %s281 = sadd.s32 %s280, 1
      %p284 = scmp.eq.s32.totalorder %s26, 1
      %p285 = scmp.ne.s32.totalorder %s280, %s282
      %p286 = scmp.eq.s32.totalorder %s26, 0
      %p287 = por %p285, %p286
      %p288 = scmp.ne.s32.totalorder %s280, %s282
      %p289 = scmp.eq.s32.totalorder %s31, 1
      %p290 = por %p288, %p289
      %p291 = scmp.ne.s32.totalorder %s282, %s283
      %p292 = scmp.eq.s32.totalorder %s31, 0
      %p293 = por %p291, %p292
      %p294 = scmp.ne.s32.totalorder %s282, %s283
      %p295 = scmp.eq.s32.totalorder %s32, 1
      %p296 = por %p294, %p295
      %p298 = scmp.ne.s32.totalorder %s283, %s297
      %p299 = scmp.eq.s32.totalorder %s32, 0
      %p300 = por %p298, %p299
      %s302 = sadd.s32 %s301, 1
      %p305 = scmp.eq.s32.totalorder %s26, 1
      %p306 = scmp.ne.s32.totalorder %s301, %s303
      %p307 = scmp.eq.s32.totalorder %s26, 0
      %p308 = por %p306, %p307
      %p309 = scmp.ne.s32.totalorder %s301, %s303
      %p310 = scmp.eq.s32.totalorder %s31, 1
      %p311 = por %p309, %p310
      %p312 = scmp.ne.s32.totalorder %s303, %s304
      %p313 = scmp.eq.s32.totalorder %s31, 0
      %p314 = por %p312, %p313
      %p315 = scmp.ne.s32.totalorder %s303, %s304
      %p316 = scmp.eq.s32.totalorder %s32, 1
      %p317 = por %p315, %p316
      %p319 = scmp.ne.s32.totalorder %s304, %s318
      %p320 = scmp.eq.s32.totalorder %s32, 0
      %p321 = por %p319, %p320
      %s322 = ssub.s32 %s26, %s33
      %p323 = scmp.eq.s32.totalorder %s322, 0
      %s325 = sadd.s32 %s324, 1
      %s326 = scalar_select %p323, %s324, %s325
      %p329 = pneg %p323
      %p330 = scmp.eq.s32.totalorder %s26, 1
      %p331 = por %p329, %p330
      %p332 = scmp.ne.s32.totalorder %s324, %s327
      %p333 = scmp.eq.s32.totalorder %s26, 0
      %p334 = por %p332, %p333
      %p335 = scmp.ne.s32.totalorder %s324, %s327
      %p336 = scmp.eq.s32.totalorder %s31, 1
      %p337 = por %p335, %p336
      %p338 = scmp.ne.s32.totalorder %s327, %s328
      %p339 = scmp.eq.s32.totalorder %s31, 0
      %p340 = por %p338, %p339
      %p341 = scmp.ne.s32.totalorder %s327, %s328
      %p342 = scmp.eq.s32.totalorder %s32, 1
      %p343 = por %p341, %p342
      %p345 = scmp.ne.s32.totalorder %s328, %s344
      %p346 = scmp.eq.s32.totalorder %s32, 0
      %p347 = por %p345, %p346
      %p348 = scmp.le.s32.totalorder 1, %s26
      %p349 = scmp.lt.s32.totalorder %s26, 3
      %p350 = pnand %p348, %p349
      %p351 = pneg %p350
      // Predicated region
      $region9: #{tpu_custom_call.1} parent=5 // pred_check
        _
      $region10: #{tpu_custom_call.1} parent=5 // pred_check_branch
        %353 = sbr.rel (%p350) target = $region12
      $region11: #{tpu_custom_call.1} parent=5 // pred_region
        %s354 = ssub.s32 %s26, 1
        // Predicated region
        $region13: #{tpu_custom_call.1} parent=11 // pred_check
          %p355 = pneg %p125
        $region14: #{tpu_custom_call.1} parent=11 // pred_check_branch
          %357 = sbr.rel (%p355) target = $region16
        $region15: #{tpu_custom_call.1} parent=11 // pred_region
          %s359 = ssub.s32 128, 128
          %360 = vsyncadd [#allocation6], %s359
          %s362 = sshll.u32 [#allocation5], 4
          %s363 = int_to_ptr.vmem [resolvable:$true] %s362
          %365 = dma.hbm_to_vmem [thread:$0]  %s3, 128, %s363, [#allocation6]
        $region16: #{tpu_custom_call.1} parent=11 // pred_fallthru
          _
        // Predicated region
        $region17: #{tpu_custom_call.1} parent=11 // pred_check
          %p366 = pneg %p146
        $region18: #{tpu_custom_call.1} parent=11 // pred_check_branch
          %368 = sbr.rel (%p366) target = $region20
        $region19: #{tpu_custom_call.1} parent=11 // pred_region
          _
        $region20: #{tpu_custom_call.1} parent=11 // pred_fallthru
          _
        // Predicated region
        $region21: #{tpu_custom_call.1} parent=11 // pred_check
          %p369 = pneg %p167
        $region22: #{tpu_custom_call.1} parent=11 // pred_check_branch
          %371 = sbr.rel (%p369) target = $region24
        $region23: #{tpu_custom_call.1} parent=11 // pred_region
          _
        $region24: #{tpu_custom_call.1} parent=11 // pred_fallthru
          _
        // Predicated region
        $region25: #{tpu_custom_call.1} parent=11 // pred_check
          %p372 = pneg %p188
        $region26: #{tpu_custom_call.1} parent=11 // pred_check_branch
          %374 = sbr.rel (%p372) target = $region28
        $region27: #{tpu_custom_call.1} parent=11 // pred_region
          _
        $region28: #{tpu_custom_call.1} parent=11 // pred_fallthru
          _
        // Predicated region
        $region29: #{tpu_custom_call.1} parent=11 // pred_check
          %p375 = pneg %p209
        $region30: #{tpu_custom_call.1} parent=11 // pred_check_branch
          %377 = sbr.rel (%p375) target = $region32
        $region31: #{tpu_custom_call.1} parent=11 // pred_region
          _
        $region32: #{tpu_custom_call.1} parent=11 // pred_fallthru
          _
        // Predicated region
        $region33: #{tpu_custom_call.1} parent=11 // pred_check
          %p378 = pneg %p230
        $region34: #{tpu_custom_call.1} parent=11 // pred_check_branch
          %380 = sbr.rel (%p378) target = $region36
        $region35: #{tpu_custom_call.1} parent=11 // pred_region
          _
        $region36: #{tpu_custom_call.1} parent=11 // pred_fallthru
          _
        // Predicated region
        $region37: #{tpu_custom_call.1} parent=11 // pred_check
          %p381 = pneg %p251
        $region38: #{tpu_custom_call.1} parent=11 // pred_check_branch
          %383 = sbr.rel (%p381) target = $region40
        $region39: #{tpu_custom_call.1} parent=11 // pred_region
          %s385 = ssub.s32 512, 512
          %386 = vsyncadd [#allocation6], %s385
          %s387 = sshll.u32 [#allocation7], 4
          %s388 = int_to_ptr.vmem [resolvable:$true] %s387
          %393 = dma.hbm_to_vmem [thread:$0]  %s9, 512, %s388, [#allocation6], 128, 128, 8
        $region40: #{tpu_custom_call.1} parent=11 // pred_fallthru
          _
        // Predicated region
        $region41: #{tpu_custom_call.1} parent=11 // pred_check
          %p394 = pneg %p272
        $region42: #{tpu_custom_call.1} parent=11 // pred_check_branch
          %396 = sbr.rel (%p394) target = $region44
        $region43: #{tpu_custom_call.1} parent=11 // pred_region
          _
        $region44: #{tpu_custom_call.1} parent=11 // pred_fallthru
          _
        // Predicated region
        $region45: #{tpu_custom_call.1} parent=11 // pred_check
          %p397 = pneg %p293
        $region46: #{tpu_custom_call.1} parent=11 // pred_check_branch
          %399 = sbr.rel (%p397) target = $region48
        $region47: #{tpu_custom_call.1} parent=11 // pred_region
          _
        $region48: #{tpu_custom_call.1} parent=11 // pred_fallthru
          _
        // Predicated region
        $region49: #{tpu_custom_call.1} parent=11 // pred_check
          %p400 = pneg %p314
        $region50: #{tpu_custom_call.1} parent=11 // pred_check_branch
          %402 = sbr.rel (%p400) target = $region52
        $region51: #{tpu_custom_call.1} parent=11 // pred_region
          _
        $region52: #{tpu_custom_call.1} parent=11 // pred_fallthru
          _
      $region12: #{tpu_custom_call.1} parent=5 // pred_fallthru
        _
      %p403 = scmp.lt.s32.totalorder %s26, 2
      // Predicated region
      $region53: #{tpu_custom_call.1} parent=5 // pred_check
        %p404 = pneg %p403
      $region54: #{tpu_custom_call.1} parent=5 // pred_check_branch
        %406 = sbr.rel (%p404) target = $region56
      $region55: #{tpu_custom_call.1} parent=5 // pred_region
        // Predicated region
        $region57: #{tpu_custom_call.1} parent=55 // pred_check
          %p407 = pneg %p46
        $region58: #{tpu_custom_call.1} parent=55 // pred_check_branch
          %409 = sbr.rel (%p407) target = $region60
        $region59: #{tpu_custom_call.1} parent=55 // pred_region
          %s410 = smul.u32 8, %s26
          %p411 = scmp.lt.s32.totalorder %s410, 15
          %s412 = scalar_select %p411, %s410, 15
          %s413 = smul.addr %s412, 8
          %s414 = scalar_lea.vmem %s0, %s413
          %s415 = smul.u32 8, %s26
        $region60: #{tpu_custom_call.1} parent=55 // pred_fallthru
          _
        // Predicated region
        $region61: #{tpu_custom_call.1} parent=55 // pred_check
          %p416 = pneg %p72
        $region62: #{tpu_custom_call.1} parent=55 // pred_check_branch
          %418 = sbr.rel (%p416) target = $region64
        $region63: #{tpu_custom_call.1} parent=55 // pred_region
          %p419 = scmp.lt.s32.totalorder %s26, 1
          %s420 = scalar_select %p419, %s26, 1
          %s421 = smul.addr %s420, 8
          %s422 = smul.addr %s421, 8
          %s423 = scalar_lea.vmem %s1, %s422
        $region64: #{tpu_custom_call.1} parent=55 // pred_fallthru
          _
        // Predicated region
        $region65: #{tpu_custom_call.1} parent=55 // pred_check
          %p424 = pneg %p98
        $region66: #{tpu_custom_call.1} parent=55 // pred_check_branch
          %426 = sbr.rel (%p424) target = $region68
        $region67: #{tpu_custom_call.1} parent=55 // pred_region
          %s427 = sand.u32 %s88, 1
          %s428 = scalar_lea.sflag [#allocation3], %s427
          %s429 = sand.u32 %s88, 1
          %s430 = smul.addr %s429, 8
          %s431 = scalar_lea.vmem [#allocation2], %s430
          %s433 = ssub.s32 128, 128
          %434 = vsyncadd %s428, %s433
          %s435 = smul.addr %s26, 128
          %s436 = scalar_lea.hbm %s2, %s435
          %s438 = sshll.u32 %s431, 4
          %s439 = int_to_ptr.vmem [resolvable:$true] %s438
          %441 = dma.hbm_to_vmem [thread:$0]  %s436, 128, %s439, %s428
        $region68: #{tpu_custom_call.1} parent=55 // pred_fallthru
          _
      $region56: #{tpu_custom_call.1} parent=5 // pred_fallthru
        _
      %p442 = scmp.le.s32.totalorder 1, %s26
      %p443 = scmp.lt.s32.totalorder %s26, 3
      %p444 = pnand %p442, %p443
      %p445 = pneg %p444
      // Predicated region
      $region69: #{tpu_custom_call.1} parent=5 // pred_check
        _
      $region70: #{tpu_custom_call.1} parent=5 // pred_check_branch
        %447 = sbr.rel (%p444) target = $region72
      $region71: #{tpu_custom_call.1} parent=5 // pred_region
        %s448 = ssub.s32 %s26, 1
        %s449 = sand.u32 %s91, 1
        %s450 = scalar_lea.sflag [#allocation3], %s449
        %s451 = sand.u32 %s91, 1
        %s452 = smul.addr %s451, 8
        %s453 = scalar_lea.vmem [#allocation2], %s452
        // Predicated region
        $region73: #{tpu_custom_call.1} parent=71 // pred_check
          %p454 = pneg %p104
        $region74: #{tpu_custom_call.1} parent=71 // pred_check_branch
          %456 = sbr.rel (%p454) target = $region76
        $region75: #{tpu_custom_call.1} parent=71 // pred_region
          %457 = dma.done %s450, 128
        $region76: #{tpu_custom_call.1} parent=71 // pred_fallthru
          _
        // Predicated region
        $region77: #{tpu_custom_call.1} parent=71 // pred_check
          %p458 = pneg %p125
        $region78: #{tpu_custom_call.1} parent=71 // pred_check_branch
          %460 = sbr.rel (%p458) target = $region80
        $region79: #{tpu_custom_call.1} parent=71 // pred_region
          %461 = dma.done [#allocation6], 128
        $region80: #{tpu_custom_call.1} parent=71 // pred_fallthru
          _
        // Predicated region
        $region81: #{tpu_custom_call.1} parent=71 // pred_check
          %p462 = pneg %p251
        $region82: #{tpu_custom_call.1} parent=71 // pred_check_branch
          %464 = sbr.rel (%p462) target = $region84
        $region83: #{tpu_custom_call.1} parent=71 // pred_region
          %465 = dma.done [#allocation6], 512
        $region84: #{tpu_custom_call.1} parent=71 // pred_fallthru
          _
        %s466 = smul.u32 8, %s31
        %p467 = scmp.lt.s32.totalorder %s466, 15
        %s468 = scalar_select %p467, %s466, 15
        %s469 = smul.addr %s468, 8
        %s470 = scalar_lea.vmem %s0, %s469
        %p471 = pneg %p52
        %p472 = pneg %p49
        %p473 = scmp.lt.s32.totalorder %s31, 1
        %s474 = scalar_select %p473, %s31, 1
        %s475 = smul.addr %s474, 8
        %s476 = smul.addr %s475, 8
        %s477 = scalar_lea.vmem %s1, %s476
        %p478 = pneg %p78
        %p479 = pneg %p75
        %s480 = sand.u32 %s91, 1
        %s481 = scalar_lea.sflag [#allocation3], %s480
        %s482 = sand.u32 %s91, 1
        %s483 = smul.addr %s482, 8
        %s484 = scalar_lea.vmem [#allocation2], %s483
        %p485 = pneg %p104
        %p486 = pneg %p101
        %p487 = pneg %p125
        %p488 = pneg %p122
        %p489 = pneg %p146
        %p490 = pneg %p143
        %p491 = pneg %p167
        %p492 = pneg %p164
        %p493 = pneg %p188
        %p494 = pneg %p185
        %p495 = pneg %p209
        %p496 = pneg %p206
        %p497 = pneg %p230
        %p498 = pneg %p227
        %p499 = pneg %p251
        %p500 = pneg %p248
        %p501 = pneg %p272
        %p502 = pneg %p269
        %p503 = pneg %p293
        %p504 = pneg %p290
        %p505 = pneg %p314
        %p506 = pneg %p311
        %p507 = pneg %p340
        %p508 = pneg %p337
        %s509 = sand.u32 %s327, 1
        %s510 = scalar_lea.sflag [#allocation4], %s509
        %s511 = sand.u32 %s327, 1
        %s512 = smul.addr %s511, 8
        %s513 = scalar_lea.vmem [#allocation8], %s512
        %s514 = smul.u32 8, %s31
        %p515 = scmp.lt.s32.totalorder %s514, 15
        %s516 = scalar_select %p515, %s514, 15
        %s517 = smul.addr %s516, 8
        %s518 = scalar_lea.vmem %s0, %s517
        %s519 = smul.u32 8, %s31
        %p520 = scmp.lt.s32.totalorder %s31, 1
        %s521 = scalar_select %p520, %s31, 1
        %s522 = smul.addr %s521, 8
        %s523 = smul.addr %s522, 8
        %s524 = scalar_lea.vmem %s1, %s523
        %v525 = vld [vmem:[%s524] sm:$0xff]
        %v526 = vld [vmem:[%s524 + $0x8] sm:$0xff]
        %v527 = vld [vmem:[%s524 + $0x10] sm:$0xff]
        %v528 = vld [vmem:[%s524 + $0x18] sm:$0xff]
        %v529 = vld [vmem:[%s524 + $0x20] sm:$0xff]
        %v530 = vld [vmem:[%s524 + $0x28] sm:$0xff]
        %v531 = vld [vmem:[%s524 + $0x30] sm:$0xff]
        %v532 = vld [vmem:[%s524 + $0x38] sm:$0xff]
        %v533 = vld [vmem:[%s518] sm:$0xff]
        %v534 = vld [vmem:[%s518 + $0x8] sm:$0xff]
        %v535 = vld [vmem:[%s518 + $0x10] sm:$0xff]
        %v536 = vld [vmem:[%s518 + $0x18] sm:$0xff]
        %v537 = vld [vmem:[%s518 + $0x20] sm:$0xff]
        %v538 = vld [vmem:[%s518 + $0x28] sm:$0xff]
        %v539 = vld [vmem:[%s518 + $0x30] sm:$0xff]
        %v540 = vld [vmem:[%s518 + $0x38] sm:$0xff]
        %vm541 = vcmask 523264
        %v543 = vsel %vm541, %v525, 0
        %v546 = vsel %vm541, %v526, 0
        %v549 = vsel %vm541, %v527, 0
        %v552 = vsel %vm541, %v528, 0
        %v555 = vsel %vm541, %v529, 0
        %v558 = vsel %vm541, %v530, 0
        %v561 = vsel %vm541, %v531, 0
        %v564 = vsel %vm541, %v532, 0
        %566 = vmatprep.subr.mxu0 0.0
        %567 = vmatpush1.msra.mxu0 0.0
        %568 = vmatprep.subr.mxu0 0.0
        %569 = vmatpush1.msra.mxu0 0.0
        %570 = vmatprep.subr.mxu0 0.0
        %571 = vmatpush1.msra.mxu0 0.0
        %572 = vmatprep.subr.mxu0 0.0
        %573 = vmatpush1.msra.mxu0 0.0
        %574 = vmatprep.subr.mxu0 0.0
        %575 = vmatpush1.msra.mxu0 0.0
        %576 = vmatprep.subr.mxu0 0.0
        %577 = vmatpush1.msra.mxu0 0.0
        %578 = vmatprep.subr.mxu0 0.0
        %579 = vmatpush1.msra.mxu0 0.0
        %580 = vmatprep.subr.mxu0 0.0
        %581 = vmatpush1.msra.mxu0 0.0
        %582 = vmatprep.subr.mxu0 0.0
        %583 = vmatpush1.msra.mxu0 %v540
        %584 = vmatprep.subr.mxu0 0.0
        %585 = vmatpush1.msra.mxu0 %v539
        %586 = vmatprep.subr.mxu0 0.0
        %587 = vmatpush1.msra.mxu0 %v538
        %588 = vmatprep.subr.mxu0 0.0
        %589 = vmatpush1.msra.mxu0 %v537
        %590 = vmatprep.subr.mxu0 0.0
        %591 = vmatpush1.msra.mxu0 %v536
        %592 = vmatprep.subr.mxu0 0.0
        %593 = vmatpush1.msra.mxu0 %v535
        %594 = vmatprep.subr.mxu0 0.0
        %595 = vmatpush1.msra.mxu0 %v534
        %596 = vmatprep.subr.mxu0 0.0
        %597 = vmatpush1.msra.mxu0 %v533
        %598 = vmatprep.subr.mxu0 0.0
        %599 = vmatpush2.msra.mxu0 0.0
        %600 = vmatprep.subr.mxu0 0.0
        %601 = vmatpush2.msra.mxu0 0.0
        %602 = vmatprep.subr.mxu0 0.0
        %603 = vmatpush2.msra.mxu0 0.0
        %604 = vmatprep.subr.mxu0 0.0
        %605 = vmatpush2.msra.mxu0 0.0
        %606 = vmatprep.subr.mxu0 0.0
        %607 = vmatpush2.msra.mxu0 0.0
        %608 = vmatprep.subr.mxu0 0.0
        %609 = vmatpush2.msra.mxu0 0.0
        %610 = vmatprep.subr.mxu0 0.0
        %611 = vmatpush2.msra.mxu0 0.0
        %612 = vmatprep.subr.mxu0 0.0
        %613 = vmatpush2.msra.mxu0 0.0
        %614 = vmatprep.subr.mxu0 0.0
        %615 = vmatpush2.msra.mxu0 0.0
        %616 = vmatprep.subr.mxu0 0.0
        %617 = vmatpush2.msra.mxu0 0.0
        %618 = vmatprep.subr.mxu0 0.0
        %619 = vmatpush2.msra.mxu0 0.0
        %620 = vmatprep.subr.mxu0 0.0
        %621 = vmatpush2.msra.mxu0 0.0
        %622 = vmatprep.subr.mxu0 0.0
        %623 = vmatpush2.msra.mxu0 0.0
        %624 = vmatprep.subr.mxu0 0.0
        %625 = vmatpush2.msra.mxu0 0.0
        %626 = vmatprep.subr.mxu0 0.0
        %627 = vmatpush2.msra.mxu0 0.0
        %628 = vmatprep.subr.mxu0 0.0
        %629 = vmatpush2.msra.mxu0 0.0
        %630 = vmatprep.mubr.f32.mxu0 0.0
        %631 = vmatmul.mubr.f32.gmra.mxu0 %v543
        %v632 = vpop.f32.mrf.mxu0
        %v633 = vadd.f32 0.0, %v632
        %v634 = vpop.f32.mrf.mxu0
        %635 = vmatprep.mubr.f32.mxu0 0.0
        %636 = vmatmul.mubr.f32.gmra.mxu0 %v546
        %v637 = vpop.f32.mrf.mxu0
        %v638 = vadd.f32 0.0, %v637
        %v639 = vpop.f32.mrf.mxu0
        %640 = vmatprep.mubr.f32.mxu0 0.0
        %641 = vmatmul.mubr.f32.gmra.mxu0 %v549
        %v642 = vpop.f32.mrf.mxu0
        %v643 = vadd.f32 0.0, %v642
        %v644 = vpop.f32.mrf.mxu0
        %645 = vmatprep.mubr.f32.mxu0 0.0
        %646 = vmatmul.mubr.f32.gmra.mxu0 %v552
        %v647 = vpop.f32.mrf.mxu0
        %v648 = vadd.f32 0.0, %v647
        %v649 = vpop.f32.mrf.mxu0
        %650 = vmatprep.mubr.f32.mxu0 0.0
        %651 = vmatmul.mubr.f32.gmra.mxu0 %v555
        %v652 = vpop.f32.mrf.mxu0
        %v653 = vadd.f32 0.0, %v652
        %v654 = vpop.f32.mrf.mxu0
        %655 = vmatprep.mubr.f32.mxu0 0.0
        %656 = vmatmul.mubr.f32.gmra.mxu0 %v558
        %v657 = vpop.f32.mrf.mxu0
        %v658 = vadd.f32 0.0, %v657
        %v659 = vpop.f32.mrf.mxu0
        %660 = vmatprep.mubr.f32.mxu0 0.0
        %661 = vmatmul.mubr.f32.gmra.mxu0 %v561
        %v662 = vpop.f32.mrf.mxu0
        %v663 = vadd.f32 0.0, %v662
        %v664 = vpop.f32.mrf.mxu0
        %665 = vmatprep.mubr.f32.mxu0 0.0
        %666 = vmatmul.mubr.f32.gmra.mxu0 %v564
        %v667 = vpop.f32.mrf.mxu0
        %v668 = vadd.f32 0.0, %v667
        %v669 = vpop.f32.mrf.mxu0
        %670 = vdwg.mxu0
        %v671 = vld [vmem:[#allocation5] sm:$0xff]
        %v672 = vld [vmem:[%s4] sm:$0x1]
        %v674 = vlaneseq
        %v675 = vshrl.u32 %v674, 7
        %v676 = vsub.s32 0, %v675
        %v677 = vrot.slane %v672, %v676
        %vm679 = vcmask 64512
        %v681 = vsel %vm679, %v633, 0
        %v684 = vsel %vm679, %v638, 0
        %v687 = vsel %vm679, %v643, 0
        %v690 = vsel %vm679, %v648, 0
        %v693 = vsel %vm679, %v653, 0
        %v696 = vsel %vm679, %v658, 0
        %v699 = vsel %vm679, %v663, 0
        %v702 = vsel %vm679, %v668, 0
        %704 = vmatprep.subr.mxu0 0.0
        %705 = vmatpush1.msra.mxu0 0.0
        %706 = vmatprep.subr.mxu0 0.0
        %707 = vmatpush1.msra.mxu0 0.0
        %708 = vmatprep.subr.mxu0 0.0
        %709 = vmatpush1.msra.mxu0 0.0
        %710 = vmatprep.subr.mxu0 0.0
        %711 = vmatpush1.msra.mxu0 0.0
        %712 = vmatprep.subr.mxu0 0.0
        %713 = vmatpush1.msra.mxu0 0.0
        %714 = vmatprep.subr.mxu0 0.0
        %715 = vmatpush1.msra.mxu0 0.0
        %716 = vmatprep.subr.mxu0 0.0
        %717 = vmatpush1.msra.mxu0 0.0
        %718 = vmatprep.subr.mxu0 0.0
        %719 = vmatpush1.msra.mxu0 0.0
        %720 = vmatprep.subr.mxu0 0.0
        %721 = vmatpush1.msra.mxu0 0.0
        %722 = vmatprep.subr.mxu0 0.0
        %723 = vmatpush1.msra.mxu0 0.0
        %724 = vmatprep.subr.mxu0 0.0
        %725 = vmatpush1.msra.mxu0 0.0
        %726 = vmatprep.subr.mxu0 0.0
        %727 = vmatpush1.msra.mxu0 0.0
        %728 = vmatprep.subr.mxu0 0.0
        %729 = vmatpush1.msra.mxu0 0.0
        %730 = vmatprep.subr.mxu0 0.0
        %731 = vmatpush1.msra.mxu0 0.0
        %732 = vmatprep.subr.mxu0 0.0
        %733 = vmatpush1.msra.mxu0 0.0
        %734 = vmatprep.subr.mxu0 0.0
        %735 = vmatpush1.msra.mxu0 %v671
        %736 = vmatprep.subr.mxu0 0.0
        %737 = vmatpush2.msra.mxu0 0.0
        %738 = vmatprep.subr.mxu0 0.0
        %739 = vmatpush2.msra.mxu0 0.0
        %740 = vmatprep.subr.mxu0 0.0
        %741 = vmatpush2.msra.mxu0 0.0
        %742 = vmatprep.subr.mxu0 0.0
        %743 = vmatpush2.msra.mxu0 0.0
        %744 = vmatprep.subr.mxu0 0.0
        %745 = vmatpush2.msra.mxu0 0.0
        %746 = vmatprep.subr.mxu0 0.0
        %747 = vmatpush2.msra.mxu0 0.0
        %748 = vmatprep.subr.mxu0 0.0
        %749 = vmatpush2.msra.mxu0 0.0
        %750 = vmatprep.subr.mxu0 0.0
        %751 = vmatpush2.msra.mxu0 0.0
        %752 = vmatprep.subr.mxu0 0.0
        %753 = vmatpush2.msra.mxu0 0.0
        %754 = vmatprep.subr.mxu0 0.0
        %755 = vmatpush2.msra.mxu0 0.0
        %756 = vmatprep.subr.mxu0 0.0
        %757 = vmatpush2.msra.mxu0 0.0
        %758 = vmatprep.subr.mxu0 0.0
        %759 = vmatpush2.msra.mxu0 0.0
        %760 = vmatprep.subr.mxu0 0.0
        %761 = vmatpush2.msra.mxu0 0.0
        %762 = vmatprep.subr.mxu0 0.0
        %763 = vmatpush2.msra.mxu0 0.0
        %764 = vmatprep.subr.mxu0 0.0
        %765 = vmatpush2.msra.mxu0 0.0
        %766 = vmatprep.subr.mxu0 0.0
        %767 = vmatpush2.msra.mxu0 0.0
        %768 = vmatprep.mubr.f32.mxu0 0.0
        %769 = vmatmul.mubr.f32.gmra.mxu0 %v681
        %v770 = vpop.f32.mrf.mxu0
        %v771 = vadd.f32 %v677, %v770
        %v772 = vpop.f32.mrf.mxu0
        %773 = vmatprep.mubr.f32.mxu0 0.0
        %774 = vmatmul.mubr.f32.gmra.mxu0 %v684
        %v775 = vpop.f32.mrf.mxu0
        %v776 = vadd.f32 %v677, %v775
        %v777 = vpop.f32.mrf.mxu0
        %778 = vmatprep.mubr.f32.mxu0 0.0
        %779 = vmatmul.mubr.f32.gmra.mxu0 %v687
        %v780 = vpop.f32.mrf.mxu0
        %v781 = vadd.f32 %v677, %v780
        %v782 = vpop.f32.mrf.mxu0
        %783 = vmatprep.mubr.f32.mxu0 0.0
        %784 = vmatmul.mubr.f32.gmra.mxu0 %v690
        %v785 = vpop.f32.mrf.mxu0
        %v786 = vadd.f32 %v677, %v785
        %v787 = vpop.f32.mrf.mxu0
        %788 = vmatprep.mubr.f32.mxu0 0.0
        %789 = vmatmul.mubr.f32.gmra.mxu0 %v693
        %v790 = vpop.f32.mrf.mxu0
        %v791 = vadd.f32 %v677, %v790
        %v792 = vpop.f32.mrf.mxu0
        %793 = vmatprep.mubr.f32.mxu0 0.0
        %794 = vmatmul.mubr.f32.gmra.mxu0 %v696
        %v795 = vpop.f32.mrf.mxu0
        %v796 = vadd.f32 %v677, %v795
        %v797 = vpop.f32.mrf.mxu0
        %798 = vmatprep.mubr.f32.mxu0 0.0
        %799 = vmatmul.mubr.f32.gmra.mxu0 %v699
        %v800 = vpop.f32.mrf.mxu0
        %v801 = vadd.f32 %v677, %v800
        %v802 = vpop.f32.mrf.mxu0
        %803 = vmatprep.mubr.f32.mxu0 0.0
        %804 = vmatmul.mubr.f32.gmra.mxu0 %v702
        %v805 = vpop.f32.mrf.mxu0
        %v806 = vadd.f32 %v677, %v805
        %v807 = vpop.f32.mrf.mxu0
        %808 = vdwg.mxu0
        %v809 = vmul.f32 %v771, 0.2
        %v810 = vmul.f32 %v776, 0.2
        %v811 = vmul.f32 %v781, 0.2
        %v812 = vmul.f32 %v786, 0.2
        %v813 = vmul.f32 %v791, 0.2
        %v814 = vmul.f32 %v796, 0.2
        %v815 = vmul.f32 %v801, 0.2
        %v816 = vmul.f32 %v806, 0.2
        %v817 = vmax.f32 %v771, %v809
        %v818 = vmax.f32 %v776, %v810
        %v819 = vmax.f32 %v781, %v811
        %v820 = vmax.f32 %v786, %v812
        %v821 = vmax.f32 %v791, %v813
        %v822 = vmax.f32 %v796, %v814
        %v823 = vmax.f32 %v801, %v815
        %v824 = vmax.f32 %v806, %v816
        %v825 = vld [vmem:[%s5] sm:$0xff]
        %v826 = vld [vmem:[%s5 + $0x8] sm:$0xff]
        %v827 = vld [vmem:[%s5 + $0x10] sm:$0xff]
        %v828 = vld [vmem:[%s5 + $0x18] sm:$0xff]
        %v829 = vld [vmem:[%s6] sm:$0x1]
        %v831 = vlaneseq
        %v832 = vshrl.u32 %v831, 7
        %v833 = vsub.s32 0, %v832
        %v834 = vrot.slane %v829, %v833
        %vm836 = vcmask 261120
        %v838 = vsel %vm836, %v817, 0
        %v841 = vsel %vm836, %v818, 0
        %v844 = vsel %vm836, %v819, 0
        %v847 = vsel %vm836, %v820, 0
        %v850 = vsel %vm836, %v821, 0
        %v853 = vsel %vm836, %v822, 0
        %v856 = vsel %vm836, %v823, 0
        %v859 = vsel %vm836, %v824, 0
        %861 = vmatprep.subr.mxu0 0.0
        %862 = vmatpush1.msra.mxu0 0.0
        %863 = vmatprep.subr.mxu0 0.0
        %864 = vmatpush1.msra.mxu0 0.0
        %865 = vmatprep.subr.mxu0 0.0
        %866 = vmatpush1.msra.mxu0 0.0
        %867 = vmatprep.subr.mxu0 0.0
        %868 = vmatpush1.msra.mxu0 0.0
        %869 = vmatprep.subr.mxu0 0.0
        %870 = vmatpush1.msra.mxu0 0.0
        %871 = vmatprep.subr.mxu0 0.0
        %872 = vmatpush1.msra.mxu0 0.0
        %873 = vmatprep.subr.mxu0 0.0
        %874 = vmatpush1.msra.mxu0 0.0
        %875 = vmatprep.subr.mxu0 0.0
        %876 = vmatpush1.msra.mxu0 0.0
        %877 = vmatprep.subr.mxu0 0.0
        %878 = vmatpush1.msra.mxu0 0.0
        %879 = vmatprep.subr.mxu0 0.0
        %880 = vmatpush1.msra.mxu0 0.0
        %881 = vmatprep.subr.mxu0 0.0
        %882 = vmatpush1.msra.mxu0 0.0
        %883 = vmatprep.subr.mxu0 0.0
        %884 = vmatpush1.msra.mxu0 0.0
        %885 = vmatprep.subr.mxu0 0.0
        %886 = vmatpush1.msra.mxu0 %v828
        %887 = vmatprep.subr.mxu0 0.0
        %888 = vmatpush1.msra.mxu0 %v827
        %889 = vmatprep.subr.mxu0 0.0
        %890 = vmatpush1.msra.mxu0 %v826
        %891 = vmatprep.subr.mxu0 0.0
        %892 = vmatpush1.msra.mxu0 %v825
        %893 = vmatprep.subr.mxu0 0.0
        %894 = vmatpush2.msra.mxu0 0.0
        %895 = vmatprep.subr.mxu0 0.0
        %896 = vmatpush2.msra.mxu0 0.0
        %897 = vmatprep.subr.mxu0 0.0
        %898 = vmatpush2.msra.mxu0 0.0
        %899 = vmatprep.subr.mxu0 0.0
        %900 = vmatpush2.msra.mxu0 0.0
        %901 = vmatprep.subr.mxu0 0.0
        %902 = vmatpush2.msra.mxu0 0.0
        %903 = vmatprep.subr.mxu0 0.0
        %904 = vmatpush2.msra.mxu0 0.0
        %905 = vmatprep.subr.mxu0 0.0
        %906 = vmatpush2.msra.mxu0 0.0
        %907 = vmatprep.subr.mxu0 0.0
        %908 = vmatpush2.msra.mxu0 0.0
        %909 = vmatprep.subr.mxu0 0.0
        %910 = vmatpush2.msra.mxu0 0.0
        %911 = vmatprep.subr.mxu0 0.0
        %912 = vmatpush2.msra.mxu0 0.0
        %913 = vmatprep.subr.mxu0 0.0
        %914 = vmatpush2.msra.mxu0 0.0
        %915 = vmatprep.subr.mxu0 0.0
        %916 = vmatpush2.msra.mxu0 0.0
        %917 = vmatprep.subr.mxu0 0.0
        %918 = vmatpush2.msra.mxu0 0.0
        %919 = vmatprep.subr.mxu0 0.0
        %920 = vmatpush2.msra.mxu0 0.0
        %921 = vmatprep.subr.mxu0 0.0
        %922 = vmatpush2.msra.mxu0 0.0
        %923 = vmatprep.subr.mxu0 0.0
        %924 = vmatpush2.msra.mxu0 0.0
        %925 = vmatprep.mubr.f32.mxu0 0.0
        %926 = vmatmul.mubr.f32.gmra.mxu0 %v838
        %v927 = vpop.f32.mrf.mxu0
        %v928 = vadd.f32 %v834, %v927
        %v929 = vpop.f32.mrf.mxu0
        %930 = vmatprep.mubr.f32.mxu0 0.0
        %931 = vmatmul.mubr.f32.gmra.mxu0 %v841
        %v932 = vpop.f32.mrf.mxu0
        %v933 = vadd.f32 %v834, %v932
        %v934 = vpop.f32.mrf.mxu0
        %935 = vmatprep.mubr.f32.mxu0 0.0
        %936 = vmatmul.mubr.f32.gmra.mxu0 %v844
        %v937 = vpop.f32.mrf.mxu0
        %v938 = vadd.f32 %v834, %v937
        %v939 = vpop.f32.mrf.mxu0
        %940 = vmatprep.mubr.f32.mxu0 0.0
        %941 = vmatmul.mubr.f32.gmra.mxu0 %v847
        %v942 = vpop.f32.mrf.mxu0
        %v943 = vadd.f32 %v834, %v942
        %v944 = vpop.f32.mrf.mxu0
        %945 = vmatprep.mubr.f32.mxu0 0.0
        %946 = vmatmul.mubr.f32.gmra.mxu0 %v850
        %v947 = vpop.f32.mrf.mxu0
        %v948 = vadd.f32 %v834, %v947
        %v949 = vpop.f32.mrf.mxu0
        %950 = vmatprep.mubr.f32.mxu0 0.0
        %951 = vmatmul.mubr.f32.gmra.mxu0 %v853
        %v952 = vpop.f32.mrf.mxu0
        %v953 = vadd.f32 %v834, %v952
        %v954 = vpop.f32.mrf.mxu0
        %955 = vmatprep.mubr.f32.mxu0 0.0
        %956 = vmatmul.mubr.f32.gmra.mxu0 %v856
        %v957 = vpop.f32.mrf.mxu0
        %v958 = vadd.f32 %v834, %v957
        %v959 = vpop.f32.mrf.mxu0
        %960 = vmatprep.mubr.f32.mxu0 0.0
        %961 = vmatmul.mubr.f32.gmra.mxu0 %v859
        %v962 = vpop.f32.mrf.mxu0
        %v963 = vadd.f32 %v834, %v962
        %v964 = vpop.f32.mrf.mxu0
        %965 = vdwg.mxu0
        %v966 = vmul.f32 %v928, 0.2
        %v967 = vmul.f32 %v933, 0.2
        %v968 = vmul.f32 %v938, 0.2
        %v969 = vmul.f32 %v943, 0.2
        %v970 = vmul.f32 %v948, 0.2
        %v971 = vmul.f32 %v953, 0.2
        %v972 = vmul.f32 %v958, 0.2
        %v973 = vmul.f32 %v963, 0.2
        %v974 = vmax.f32 %v928, %v966
        %v975 = vmax.f32 %v933, %v967
        %v976 = vmax.f32 %v938, %v968
        %v977 = vmax.f32 %v943, %v969
        %v978 = vmax.f32 %v948, %v970
        %v979 = vmax.f32 %v953, %v971
        %v980 = vmax.f32 %v958, %v972
        %v981 = vmax.f32 %v963, %v973
        %982 = vmatprep.subr.mxu0 0.0
        %983 = vmatpush1.msra.mxu0 0.0
        %984 = vmatprep.subr.mxu0 0.0
        %985 = vmatpush1.msra.mxu0 0.0
        %986 = vmatprep.subr.mxu0 0.0
        %987 = vmatpush1.msra.mxu0 0.0
        %988 = vmatprep.subr.mxu0 0.0
        %989 = vmatpush1.msra.mxu0 0.0
        %990 = vmatprep.subr.mxu0 0.0
        %991 = vmatpush1.msra.mxu0 0.0
        %992 = vmatprep.subr.mxu0 0.0
        %993 = vmatpush1.msra.mxu0 0.0
        %994 = vmatprep.subr.mxu0 0.0
        %995 = vmatpush1.msra.mxu0 0.0
        %996 = vmatprep.subr.mxu0 0.0
        %997 = vmatpush1.msra.mxu0 0.0
        %998 = vmatprep.subr.mxu0 0.0
        %999 = vmatpush1.msra.mxu0 %v981
        %1000 = vmatprep.subr.mxu0 0.0
        %1001 = vmatpush1.msra.mxu0 %v980
        %1002 = vmatprep.subr.mxu0 0.0
        %1003 = vmatpush1.msra.mxu0 %v979
        %1004 = vmatprep.subr.mxu0 0.0
        %1005 = vmatpush1.msra.mxu0 %v978
        %1006 = vmatprep.subr.mxu0 0.0
        %1007 = vmatpush1.msra.mxu0 %v977
        %1008 = vmatprep.subr.mxu0 0.0
        %1009 = vmatpush1.msra.mxu0 %v976
        %1010 = vmatprep.subr.mxu0 0.0
        %1011 = vmatpush1.msra.mxu0 %v975
        %1012 = vmatprep.subr.mxu0 0.0
        %1013 = vmatpush1.msra.mxu0 %v974
        %1014 = vmatprep.subr.mxu0 0.0
        %1015 = vmatpush2.msra.mxu0 0.0
        %1016 = vmatprep.subr.mxu0 0.0
        %1017 = vmatpush2.msra.mxu0 0.0
        %1018 = vmatprep.subr.mxu0 0.0
        %1019 = vmatpush2.msra.mxu0 0.0
        %1020 = vmatprep.subr.mxu0 0.0
        %1021 = vmatpush2.msra.mxu0 0.0
        %1022 = vmatprep.subr.mxu0 0.0
        %1023 = vmatpush2.msra.mxu0 0.0
        %1024 = vmatprep.subr.mxu0 0.0
        %1025 = vmatpush2.msra.mxu0 0.0
        %1026 = vmatprep.subr.mxu0 0.0
        %1027 = vmatpush2.msra.mxu0 0.0
        %1028 = vmatprep.subr.mxu0 0.0
        %1029 = vmatpush2.msra.mxu0 0.0
        %1030 = vmatprep.subr.mxu0 0.0
        %1031 = vmatpush2.msra.mxu0 0.0
        %1032 = vmatprep.subr.mxu0 0.0
        %1033 = vmatpush2.msra.mxu0 0.0
        %1034 = vmatprep.subr.mxu0 0.0
        %1035 = vmatpush2.msra.mxu0 0.0
        %1036 = vmatprep.subr.mxu0 0.0
        %1037 = vmatpush2.msra.mxu0 0.0
        %1038 = vmatprep.subr.mxu0 0.0
        %1039 = vmatpush2.msra.mxu0 0.0
        %1040 = vmatprep.subr.mxu0 0.0
        %1041 = vmatpush2.msra.mxu0 0.0
        %1042 = vmatprep.subr.mxu0 0.0
        %1043 = vmatpush2.msra.mxu0 0.0
        %1044 = vmatprep.subr.mxu0 0.0
        %1045 = vmatpush2.msra.mxu0 0.0
        %1046 = vmatprep.mubr.f32.mxu0 0.0
        %1047 = vmatmul.mubr.f32.gmra.mxu0 %v543
        %v1048 = vpop.f32.mrf.mxu0
        %v1049 = vadd.f32 0.0, %v1048
        %v1050 = vpop.f32.mrf.mxu0
        %1051 = vmatprep.mubr.f32.mxu0 0.0
        %1052 = vmatmul.mubr.f32.gmra.mxu0 %v546
        %v1053 = vpop.f32.mrf.mxu0
        %v1054 = vadd.f32 0.0, %v1053
        %v1055 = vpop.f32.mrf.mxu0
        %1056 = vmatprep.mubr.f32.mxu0 0.0
        %1057 = vmatmul.mubr.f32.gmra.mxu0 %v549
        %v1058 = vpop.f32.mrf.mxu0
        %v1059 = vadd.f32 0.0, %v1058
        %v1060 = vpop.f32.mrf.mxu0
        %1061 = vmatprep.mubr.f32.mxu0 0.0
        %1062 = vmatmul.mubr.f32.gmra.mxu0 %v552
        %v1063 = vpop.f32.mrf.mxu0
        %v1064 = vadd.f32 0.0, %v1063
        %v1065 = vpop.f32.mrf.mxu0
        %1066 = vmatprep.mubr.f32.mxu0 0.0
        %1067 = vmatmul.mubr.f32.gmra.mxu0 %v555
        %v1068 = vpop.f32.mrf.mxu0
        %v1069 = vadd.f32 0.0, %v1068
        %v1070 = vpop.f32.mrf.mxu0
        %1071 = vmatprep.mubr.f32.mxu0 0.0
        %1072 = vmatmul.mubr.f32.gmra.mxu0 %v558
        %v1073 = vpop.f32.mrf.mxu0
        %v1074 = vadd.f32 0.0, %v1073
        %v1075 = vpop.f32.mrf.mxu0
        %1076 = vmatprep.mubr.f32.mxu0 0.0
        %1077 = vmatmul.mubr.f32.gmra.mxu0 %v561
        %v1078 = vpop.f32.mrf.mxu0
        %v1079 = vadd.f32 0.0, %v1078
        %v1080 = vpop.f32.mrf.mxu0
        %1081 = vmatprep.mubr.f32.mxu0 0.0
        %1082 = vmatmul.mubr.f32.gmra.mxu0 %v564
        %v1083 = vpop.f32.mrf.mxu0
        %v1084 = vadd.f32 0.0, %v1083
        %v1085 = vpop.f32.mrf.mxu0
        %1086 = vdwg.mxu0
        %v1087 = vld [vmem:[%s7] sm:$0xff]
        %v1088 = vld [vmem:[%s7 + $0x8] sm:$0xff]
        %v1089 = vld [vmem:[%s7 + $0x10] sm:$0xff]
        %v1090 = vld [vmem:[%s7 + $0x18] sm:$0xff]
        %v1091 = vld [vmem:[%s8] sm:$0x1]
        %v1093 = vlaneseq
        %v1094 = vshrl.u32 %v1093, 7
        %v1095 = vsub.s32 0, %v1094
        %v1096 = vrot.slane %v1091, %v1095
        %v1099 = vsel %vm836, %v1049, 0
        %v1102 = vsel %vm836, %v1054, 0
        %v1105 = vsel %vm836, %v1059, 0
        %v1108 = vsel %vm836, %v1064, 0
        %v1111 = vsel %vm836, %v1069, 0
        %v1114 = vsel %vm836, %v1074, 0
        %v1117 = vsel %vm836, %v1079, 0
        %v1120 = vsel %vm836, %v1084, 0
        %1122 = vmatprep.subr.mxu0 0.0
        %1123 = vmatpush1.msra.mxu0 0.0
        %1124 = vmatprep.subr.mxu0 0.0
        %1125 = vmatpush1.msra.mxu0 0.0
        %1126 = vmatprep.subr.mxu0 0.0
        %1127 = vmatpush1.msra.mxu0 0.0
        %1128 = vmatprep.subr.mxu0 0.0
        %1129 = vmatpush1.msra.mxu0 0.0
        %1130 = vmatprep.subr.mxu0 0.0
        %1131 = vmatpush1.msra.mxu0 0.0
        %1132 = vmatprep.subr.mxu0 0.0
        %1133 = vmatpush1.msra.mxu0 0.0
        %1134 = vmatprep.subr.mxu0 0.0
        %1135 = vmatpush1.msra.mxu0 0.0
        %1136 = vmatprep.subr.mxu0 0.0
        %1137 = vmatpush1.msra.mxu0 0.0
        %1138 = vmatprep.subr.mxu0 0.0
        %1139 = vmatpush1.msra.mxu0 0.0
        %1140 = vmatprep.subr.mxu0 0.0
        %1141 = vmatpush1.msra.mxu0 0.0
        %1142 = vmatprep.subr.mxu0 0.0
        %1143 = vmatpush1.msra.mxu0 0.0
        %1144 = vmatprep.subr.mxu0 0.0
        %1145 = vmatpush1.msra.mxu0 0.0
        %1146 = vmatprep.subr.mxu0 0.0
        %1147 = vmatpush1.msra.mxu0 %v1090
        %1148 = vmatprep.subr.mxu0 0.0
        %1149 = vmatpush1.msra.mxu0 %v1089
        %1150 = vmatprep.subr.mxu0 0.0
        %1151 = vmatpush1.msra.mxu0 %v1088
        %1152 = vmatprep.subr.mxu0 0.0
        %1153 = vmatpush1.msra.mxu0 %v1087
        %1154 = vmatprep.subr.mxu0 0.0
        %1155 = vmatpush2.msra.mxu0 0.0
        %1156 = vmatprep.subr.mxu0 0.0
        %1157 = vmatpush2.msra.mxu0 0.0
        %1158 = vmatprep.subr.mxu0 0.0
        %1159 = vmatpush2.msra.mxu0 0.0
        %1160 = vmatprep.subr.mxu0 0.0
        %1161 = vmatpush2.msra.mxu0 0.0
        %1162 = vmatprep.subr.mxu0 0.0
        %1163 = vmatpush2.msra.mxu0 0.0
        %1164 = vmatprep.subr.mxu0 0.0
        %1165 = vmatpush2.msra.mxu0 0.0
        %1166 = vmatprep.subr.mxu0 0.0
        %1167 = vmatpush2.msra.mxu0 0.0
        %1168 = vmatprep.subr.mxu0 0.0
        %1169 = vmatpush2.msra.mxu0 0.0
        %1170 = vmatprep.subr.mxu0 0.0
        %1171 = vmatpush2.msra.mxu0 0.0
        %1172 = vmatprep.subr.mxu0 0.0
        %1173 = vmatpush2.msra.mxu0 0.0
        %1174 = vmatprep.subr.mxu0 0.0
        %1175 = vmatpush2.msra.mxu0 0.0
        %1176 = vmatprep.subr.mxu0 0.0
        %1177 = vmatpush2.msra.mxu0 0.0
        %1178 = vmatprep.subr.mxu0 0.0
        %1179 = vmatpush2.msra.mxu0 0.0
        %1180 = vmatprep.subr.mxu0 0.0
        %1181 = vmatpush2.msra.mxu0 0.0
        %1182 = vmatprep.subr.mxu0 0.0
        %1183 = vmatpush2.msra.mxu0 0.0
        %1184 = vmatprep.subr.mxu0 0.0
        %1185 = vmatpush2.msra.mxu0 0.0
        %1186 = vmatprep.mubr.f32.mxu0 0.0
        %1187 = vmatmul.mubr.f32.gmra.mxu0 %v1099
        %v1188 = vpop.f32.mrf.mxu0
        %v1189 = vadd.f32 %v1096, %v1188
        %v1190 = vpop.f32.mrf.mxu0
        %1191 = vmatprep.mubr.f32.mxu0 0.0
        %1192 = vmatmul.mubr.f32.gmra.mxu0 %v1102
        %v1193 = vpop.f32.mrf.mxu0
        %v1194 = vadd.f32 %v1096, %v1193
        %v1195 = vpop.f32.mrf.mxu0
        %1196 = vmatprep.mubr.f32.mxu0 0.0
        %1197 = vmatmul.mubr.f32.gmra.mxu0 %v1105
        %v1198 = vpop.f32.mrf.mxu0
        %v1199 = vadd.f32 %v1096, %v1198
        %v1200 = vpop.f32.mrf.mxu0
        %1201 = vmatprep.mubr.f32.mxu0 0.0
        %1202 = vmatmul.mubr.f32.gmra.mxu0 %v1108
        %v1203 = vpop.f32.mrf.mxu0
        %v1204 = vadd.f32 %v1096, %v1203
        %v1205 = vpop.f32.mrf.mxu0
        %1206 = vmatprep.mubr.f32.mxu0 0.0
        %1207 = vmatmul.mubr.f32.gmra.mxu0 %v1111
        %v1208 = vpop.f32.mrf.mxu0
        %v1209 = vadd.f32 %v1096, %v1208
        %v1210 = vpop.f32.mrf.mxu0
        %1211 = vmatprep.mubr.f32.mxu0 0.0
        %1212 = vmatmul.mubr.f32.gmra.mxu0 %v1114
        %v1213 = vpop.f32.mrf.mxu0
        %v1214 = vadd.f32 %v1096, %v1213
        %v1215 = vpop.f32.mrf.mxu0
        %1216 = vmatprep.mubr.f32.mxu0 0.0
        %1217 = vmatmul.mubr.f32.gmra.mxu0 %v1117
        %v1218 = vpop.f32.mrf.mxu0
        %v1219 = vadd.f32 %v1096, %v1218
        %v1220 = vpop.f32.mrf.mxu0
        %1221 = vmatprep.mubr.f32.mxu0 0.0
        %1222 = vmatmul.mubr.f32.gmra.mxu0 %v1120
        %v1223 = vpop.f32.mrf.mxu0
        %v1224 = vadd.f32 %v1096, %v1223
        %v1225 = vpop.f32.mrf.mxu0
        %1226 = vdwg.mxu0
        %v1227 = vmul.f32 %v1189, 0.2
        %v1228 = vmul.f32 %v1194, 0.2
        %v1229 = vmul.f32 %v1199, 0.2
        %v1230 = vmul.f32 %v1204, 0.2
        %v1231 = vmul.f32 %v1209, 0.2
        %v1232 = vmul.f32 %v1214, 0.2
        %v1233 = vmul.f32 %v1219, 0.2
        %v1234 = vmul.f32 %v1224, 0.2
        %v1235 = vmax.f32 %v1189, %v1227
        %v1236 = vmax.f32 %v1194, %v1228
        %v1237 = vmax.f32 %v1199, %v1229
        %v1238 = vmax.f32 %v1204, %v1230
        %v1239 = vmax.f32 %v1209, %v1231
        %v1240 = vmax.f32 %v1214, %v1232
        %v1241 = vmax.f32 %v1219, %v1233
        %v1242 = vmax.f32 %v1224, %v1234
        %v1243 = vld [vmem:[#allocation7] sm:$0xff]
        %v1244 = vld [vmem:[#allocation7 + $0x8] sm:$0xff]
        %v1245 = vld [vmem:[#allocation7 + $0x10] sm:$0xff]
        %v1246 = vld [vmem:[#allocation7 + $0x18] sm:$0xff]
        %v1247 = vld [vmem:[%s10] sm:$0x1]
        %v1249 = vlaneseq
        %v1250 = vshrl.u32 %v1249, 7
        %v1251 = vsub.s32 0, %v1250
        %v1252 = vrot.slane %v1247, %v1251
        %v1255 = vsel %vm836, %v1235, 0
        %v1258 = vsel %vm836, %v1236, 0
        %v1261 = vsel %vm836, %v1237, 0
        %v1264 = vsel %vm836, %v1238, 0
        %v1267 = vsel %vm836, %v1239, 0
        %v1270 = vsel %vm836, %v1240, 0
        %v1273 = vsel %vm836, %v1241, 0
        %v1276 = vsel %vm836, %v1242, 0
        %1278 = vmatprep.subr.mxu0 0.0
        %1279 = vmatpush1.msra.mxu0 0.0
        %1280 = vmatprep.subr.mxu0 0.0
        %1281 = vmatpush1.msra.mxu0 0.0
        %1282 = vmatprep.subr.mxu0 0.0
        %1283 = vmatpush1.msra.mxu0 0.0
        %1284 = vmatprep.subr.mxu0 0.0
        %1285 = vmatpush1.msra.mxu0 0.0
        %1286 = vmatprep.subr.mxu0 0.0
        %1287 = vmatpush1.msra.mxu0 0.0
        %1288 = vmatprep.subr.mxu0 0.0
        %1289 = vmatpush1.msra.mxu0 0.0
        %1290 = vmatprep.subr.mxu0 0.0
        %1291 = vmatpush1.msra.mxu0 0.0
        %1292 = vmatprep.subr.mxu0 0.0
        %1293 = vmatpush1.msra.mxu0 0.0
        %1294 = vmatprep.subr.mxu0 0.0
        %1295 = vmatpush1.msra.mxu0 0.0
        %1296 = vmatprep.subr.mxu0 0.0
        %1297 = vmatpush1.msra.mxu0 0.0
        %1298 = vmatprep.subr.mxu0 0.0
        %1299 = vmatpush1.msra.mxu0 0.0
        %1300 = vmatprep.subr.mxu0 0.0
        %1301 = vmatpush1.msra.mxu0 0.0
        %1302 = vmatprep.subr.mxu0 0.0
        %1303 = vmatpush1.msra.mxu0 %v1246
        %1304 = vmatprep.subr.mxu0 0.0
        %1305 = vmatpush1.msra.mxu0 %v1245
        %1306 = vmatprep.subr.mxu0 0.0
        %1307 = vmatpush1.msra.mxu0 %v1244
        %1308 = vmatprep.subr.mxu0 0.0
        %1309 = vmatpush1.msra.mxu0 %v1243
        %1310 = vmatprep.subr.mxu0 0.0
        %1311 = vmatpush2.msra.mxu0 0.0
        %1312 = vmatprep.subr.mxu0 0.0
        %1313 = vmatpush2.msra.mxu0 0.0
        %1314 = vmatprep.subr.mxu0 0.0
        %1315 = vmatpush2.msra.mxu0 0.0
        %1316 = vmatprep.subr.mxu0 0.0
        %1317 = vmatpush2.msra.mxu0 0.0
        %1318 = vmatprep.subr.mxu0 0.0
        %1319 = vmatpush2.msra.mxu0 0.0
        %1320 = vmatprep.subr.mxu0 0.0
        %1321 = vmatpush2.msra.mxu0 0.0
        %1322 = vmatprep.subr.mxu0 0.0
        %1323 = vmatpush2.msra.mxu0 0.0
        %1324 = vmatprep.subr.mxu0 0.0
        %1325 = vmatpush2.msra.mxu0 0.0
        %1326 = vmatprep.subr.mxu0 0.0
        %1327 = vmatpush2.msra.mxu0 0.0
        %1328 = vmatprep.subr.mxu0 0.0
        %1329 = vmatpush2.msra.mxu0 0.0
        %1330 = vmatprep.subr.mxu0 0.0
        %1331 = vmatpush2.msra.mxu0 0.0
        %1332 = vmatprep.subr.mxu0 0.0
        %1333 = vmatpush2.msra.mxu0 0.0
        %1334 = vmatprep.subr.mxu0 0.0
        %1335 = vmatpush2.msra.mxu0 0.0
        %1336 = vmatprep.subr.mxu0 0.0
        %1337 = vmatpush2.msra.mxu0 0.0
        %1338 = vmatprep.subr.mxu0 0.0
        %1339 = vmatpush2.msra.mxu0 0.0
        %1340 = vmatprep.subr.mxu0 0.0
        %1341 = vmatpush2.msra.mxu0 0.0
        %1342 = vmatprep.mubr.f32.mxu0 0.0
        %1343 = vmatmul.mubr.f32.gmra.mxu0 %v1255
        %v1344 = vpop.f32.mrf.mxu0
        %v1345 = vadd.f32 %v1252, %v1344
        %v1346 = vpop.f32.mrf.mxu0
        %1347 = vmatprep.mubr.f32.mxu0 0.0
        %1348 = vmatmul.mubr.f32.gmra.mxu0 %v1258
        %v1349 = vpop.f32.mrf.mxu0
        %v1350 = vadd.f32 %v1252, %v1349
        %v1351 = vpop.f32.mrf.mxu0
        %1352 = vmatprep.mubr.f32.mxu0 0.0
        %1353 = vmatmul.mubr.f32.gmra.mxu0 %v1261
        %v1354 = vpop.f32.mrf.mxu0
        %v1355 = vadd.f32 %v1252, %v1354
        %v1356 = vpop.f32.mrf.mxu0
        %1357 = vmatprep.mubr.f32.mxu0 0.0
        %1358 = vmatmul.mubr.f32.gmra.mxu0 %v1264
        %v1359 = vpop.f32.mrf.mxu0
        %v1360 = vadd.f32 %v1252, %v1359
        %v1361 = vpop.f32.mrf.mxu0
        %1362 = vmatprep.mubr.f32.mxu0 0.0
        %1363 = vmatmul.mubr.f32.gmra.mxu0 %v1267
        %v1364 = vpop.f32.mrf.mxu0
        %v1365 = vadd.f32 %v1252, %v1364
        %v1366 = vpop.f32.mrf.mxu0
        %1367 = vmatprep.mubr.f32.mxu0 0.0
        %1368 = vmatmul.mubr.f32.gmra.mxu0 %v1270
        %v1369 = vpop.f32.mrf.mxu0
        %v1370 = vadd.f32 %v1252, %v1369
        %v1371 = vpop.f32.mrf.mxu0
        %1372 = vmatprep.mubr.f32.mxu0 0.0
        %1373 = vmatmul.mubr.f32.gmra.mxu0 %v1273
        %v1374 = vpop.f32.mrf.mxu0
        %v1375 = vadd.f32 %v1252, %v1374
        %v1376 = vpop.f32.mrf.mxu0
        %1377 = vmatprep.mubr.f32.mxu0 0.0
        %1378 = vmatmul.mubr.f32.gmra.mxu0 %v1276
        %v1379 = vpop.f32.mrf.mxu0
        %v1380 = vadd.f32 %v1252, %v1379
        %v1381 = vpop.f32.mrf.mxu0
        %1382 = vdwg.mxu0
        %v1383 = vmul.f32 %v1345, 0.2
        %v1384 = vmul.f32 %v1350, 0.2
        %v1385 = vmul.f32 %v1355, 0.2
        %v1386 = vmul.f32 %v1360, 0.2
        %v1387 = vmul.f32 %v1365, 0.2
        %v1388 = vmul.f32 %v1370, 0.2
        %v1389 = vmul.f32 %v1375, 0.2
        %v1390 = vmul.f32 %v1380, 0.2
        %v1391 = vmax.f32 %v1345, %v1383
        %v1392 = vmax.f32 %v1350, %v1384
        %v1393 = vmax.f32 %v1355, %v1385
        %v1394 = vmax.f32 %v1360, %v1386
        %v1395 = vmax.f32 %v1365, %v1387
        %v1396 = vmax.f32 %v1370, %v1388
        %v1397 = vmax.f32 %v1375, %v1389
        %v1398 = vmax.f32 %v1380, %v1390
        %v1399 = vld [vmem:[%s453] sm:$0xff]
        %v1401 = vsel %vm541, %v1399, 0
        %1403 = vmatprep.subr.mxu0 0.0
        %1404 = vmatpush1.msra.mxu0 0.0
        %1405 = vmatprep.subr.mxu0 0.0
        %1406 = vmatpush1.msra.mxu0 0.0
        %1407 = vmatprep.subr.mxu0 0.0
        %1408 = vmatpush1.msra.mxu0 0.0
        %1409 = vmatprep.subr.mxu0 0.0
        %1410 = vmatpush1.msra.mxu0 0.0
        %1411 = vmatprep.subr.mxu0 0.0
        %1412 = vmatpush1.msra.mxu0 0.0
        %1413 = vmatprep.subr.mxu0 0.0
        %1414 = vmatpush1.msra.mxu0 0.0
        %1415 = vmatprep.subr.mxu0 0.0
        %1416 = vmatpush1.msra.mxu0 0.0
        %1417 = vmatprep.subr.mxu0 0.0
        %1418 = vmatpush1.msra.mxu0 0.0
        %1419 = vmatprep.subr.mxu0 0.0
        %1420 = vmatpush1.msra.mxu0 %v1398
        %1421 = vmatprep.subr.mxu0 0.0
        %1422 = vmatpush1.msra.mxu0 %v1397
        %1423 = vmatprep.subr.mxu0 0.0
        %1424 = vmatpush1.msra.mxu0 %v1396
        %1425 = vmatprep.subr.mxu0 0.0
        %1426 = vmatpush1.msra.mxu0 %v1395
        %1427 = vmatprep.subr.mxu0 0.0
        %1428 = vmatpush1.msra.mxu0 %v1394
        %1429 = vmatprep.subr.mxu0 0.0
        %1430 = vmatpush1.msra.mxu0 %v1393
        %1431 = vmatprep.subr.mxu0 0.0
        %1432 = vmatpush1.msra.mxu0 %v1392
        %1433 = vmatprep.subr.mxu0 0.0
        %1434 = vmatpush1.msra.mxu0 %v1391
        %1435 = vmatprep.subr.mxu0 0.0
        %1436 = vmatpush2.msra.mxu0 0.0
        %1437 = vmatprep.subr.mxu0 0.0
        %1438 = vmatpush2.msra.mxu0 0.0
        %1439 = vmatprep.subr.mxu0 0.0
        %1440 = vmatpush2.msra.mxu0 0.0
        %1441 = vmatprep.subr.mxu0 0.0
        %1442 = vmatpush2.msra.mxu0 0.0
        %1443 = vmatprep.subr.mxu0 0.0
        %1444 = vmatpush2.msra.mxu0 0.0
        %1445 = vmatprep.subr.mxu0 0.0
        %1446 = vmatpush2.msra.mxu0 0.0
        %1447 = vmatprep.subr.mxu0 0.0
        %1448 = vmatpush2.msra.mxu0 0.0
        %1449 = vmatprep.subr.mxu0 0.0
        %1450 = vmatpush2.msra.mxu0 0.0
        %1451 = vmatprep.subr.mxu0 0.0
        %1452 = vmatpush2.msra.mxu0 0.0
        %1453 = vmatprep.subr.mxu0 0.0
        %1454 = vmatpush2.msra.mxu0 0.0
        %1455 = vmatprep.subr.mxu0 0.0
        %1456 = vmatpush2.msra.mxu0 0.0
        %1457 = vmatprep.subr.mxu0 0.0
        %1458 = vmatpush2.msra.mxu0 0.0
        %1459 = vmatprep.subr.mxu0 0.0
        %1460 = vmatpush2.msra.mxu0 0.0
        %1461 = vmatprep.subr.mxu0 0.0
        %1462 = vmatpush2.msra.mxu0 0.0
        %1463 = vmatprep.subr.mxu0 0.0
        %1464 = vmatpush2.msra.mxu0 0.0
        %1465 = vmatprep.subr.mxu0 0.0
        %1466 = vmatpush2.msra.mxu0 0.0
        %1467 = vmatprep.mubr.f32.mxu0 0.0
        %1468 = vmatmul.mubr.f32.gmra.mxu0 %v1401
        %v1469 = vpop.f32.mrf.mxu0
        %v1470 = vadd.f32 0.0, %v1469
        %v1471 = vpop.f32.mrf.mxu0
        %1472 = vdwg.mxu0
        %v1473 = vld [vmem:[%s11] sm:$0xff]
        %v1474 = vld [vmem:[%s11 + $0x8] sm:$0xff]
        %v1475 = vld [vmem:[%s11 + $0x10] sm:$0xff]
        %v1476 = vld [vmem:[%s11 + $0x18] sm:$0xff]
        %v1477 = vld [vmem:[%s12] sm:$0x1]
        %v1479 = vlaneseq
        %v1480 = vshrl.u32 %v1479, 7
        %v1481 = vsub.s32 0, %v1480
        %v1482 = vrot.slane %v1477, %v1481
        %v1485 = vsel %vm836, %v1470, 0
        %1487 = vmatprep.subr.mxu0 0.0
        %1488 = vmatpush1.msra.mxu0 0.0
        %1489 = vmatprep.subr.mxu0 0.0
        %1490 = vmatpush1.msra.mxu0 0.0
        %1491 = vmatprep.subr.mxu0 0.0
        %1492 = vmatpush1.msra.mxu0 0.0
        %1493 = vmatprep.subr.mxu0 0.0
        %1494 = vmatpush1.msra.mxu0 0.0
        %1495 = vmatprep.subr.mxu0 0.0
        %1496 = vmatpush1.msra.mxu0 0.0
        %1497 = vmatprep.subr.mxu0 0.0
        %1498 = vmatpush1.msra.mxu0 0.0
        %1499 = vmatprep.subr.mxu0 0.0
        %1500 = vmatpush1.msra.mxu0 0.0
        %1501 = vmatprep.subr.mxu0 0.0
        %1502 = vmatpush1.msra.mxu0 0.0
        %1503 = vmatprep.subr.mxu0 0.0
        %1504 = vmatpush1.msra.mxu0 0.0
        %1505 = vmatprep.subr.mxu0 0.0
        %1506 = vmatpush1.msra.mxu0 0.0
        %1507 = vmatprep.subr.mxu0 0.0
        %1508 = vmatpush1.msra.mxu0 0.0
        %1509 = vmatprep.subr.mxu0 0.0
        %1510 = vmatpush1.msra.mxu0 0.0
        %1511 = vmatprep.subr.mxu0 0.0
        %1512 = vmatpush1.msra.mxu0 %v1476
        %1513 = vmatprep.subr.mxu0 0.0
        %1514 = vmatpush1.msra.mxu0 %v1475
        %1515 = vmatprep.subr.mxu0 0.0
        %1516 = vmatpush1.msra.mxu0 %v1474
        %1517 = vmatprep.subr.mxu0 0.0
        %1518 = vmatpush1.msra.mxu0 %v1473
        %1519 = vmatprep.subr.mxu0 0.0
        %1520 = vmatpush2.msra.mxu0 0.0
        %1521 = vmatprep.subr.mxu0 0.0
        %1522 = vmatpush2.msra.mxu0 0.0
        %1523 = vmatprep.subr.mxu0 0.0
        %1524 = vmatpush2.msra.mxu0 0.0
        %1525 = vmatprep.subr.mxu0 0.0
        %1526 = vmatpush2.msra.mxu0 0.0
        %1527 = vmatprep.subr.mxu0 0.0
        %1528 = vmatpush2.msra.mxu0 0.0
        %1529 = vmatprep.subr.mxu0 0.0
        %1530 = vmatpush2.msra.mxu0 0.0
        %1531 = vmatprep.subr.mxu0 0.0
        %1532 = vmatpush2.msra.mxu0 0.0
        %1533 = vmatprep.subr.mxu0 0.0
        %1534 = vmatpush2.msra.mxu0 0.0
        %1535 = vmatprep.subr.mxu0 0.0
        %1536 = vmatpush2.msra.mxu0 0.0
        %1537 = vmatprep.subr.mxu0 0.0
        %1538 = vmatpush2.msra.mxu0 0.0
        %1539 = vmatprep.subr.mxu0 0.0
        %1540 = vmatpush2.msra.mxu0 0.0
        %1541 = vmatprep.subr.mxu0 0.0
        %1542 = vmatpush2.msra.mxu0 0.0
        %1543 = vmatprep.subr.mxu0 0.0
        %1544 = vmatpush2.msra.mxu0 0.0
        %1545 = vmatprep.subr.mxu0 0.0
        %1546 = vmatpush2.msra.mxu0 0.0
        %1547 = vmatprep.subr.mxu0 0.0
        %1548 = vmatpush2.msra.mxu0 0.0
        %1549 = vmatprep.subr.mxu0 0.0
        %1550 = vmatpush2.msra.mxu0 0.0
        %1551 = vmatprep.mubr.f32.mxu0 0.0
        %1552 = vmatmul.mubr.f32.gmra.mxu0 %v1485
        %v1553 = vpop.f32.mrf.mxu0
        %v1554 = vadd.f32 %v1482, %v1553
        %v1555 = vpop.f32.mrf.mxu0
        %1556 = vdwg.mxu0
        %vm1557 = vcmask 130048
        %1558 = vst.msk [vmem:[%s513] sm:$0xff] %vm1557, %v1554
        %s1559 = sand.u32 %s327, 1
        %s1560 = scalar_lea.sflag [#allocation4], %s1559
        %s1561 = sand.u32 %s327, 1
        %s1562 = smul.addr %s1561, 8
        %s1563 = scalar_lea.vmem [#allocation8], %s1562
        // Predicated region
        $region85: #{tpu_custom_call.1} parent=71 // pred_check
          %p1564 = pneg %p337
        $region86: #{tpu_custom_call.1} parent=71 // pred_check_branch
          %1566 = sbr.rel (%p1564) target = $region88
        $region87: #{tpu_custom_call.1} parent=71 // pred_region
          %s1568 = ssub.s32 128, 128
          %1569 = vsyncadd %s1560, %s1568
          %s1570 = smul.addr %s31, 128
          %s1571 = scalar_lea.hbm %s13, %s1570
          %s1573 = sshll.u32 %s1563, 4
          %s1574 = int_to_ptr.vmem [resolvable:$true] %s1573
          %1576 = dma.vmem_to_hbm [thread:$0]  %s1574, 128, %s1571, %s1560
        $region88: #{tpu_custom_call.1} parent=71 // pred_fallthru
          _
      $region72: #{tpu_custom_call.1} parent=5 // pred_fallthru
        _
      %p1577 = scmp.le.s32.totalorder 2, %s26
      // Predicated region
      $region89: #{tpu_custom_call.1} parent=5 // pred_check
        %p1578 = pneg %p1577
      $region90: #{tpu_custom_call.1} parent=5 // pred_check_branch
        %1580 = sbr.rel (%p1578) target = $region92
      $region91: #{tpu_custom_call.1} parent=5 // pred_region
        %s1581 = ssub.s32 %s26, 2
        // Predicated region
        $region93: #{tpu_custom_call.1} parent=91 // pred_check
          %p1582 = pneg %p343
        $region94: #{tpu_custom_call.1} parent=91 // pred_check_branch
          %1584 = sbr.rel (%p1582) target = $region96
        $region95: #{tpu_custom_call.1} parent=91 // pred_region
          %s1585 = sand.u32 %s328, 1
          %s1586 = scalar_lea.sflag [#allocation4], %s1585
          %s1587 = sand.u32 %s328, 1
          %s1588 = smul.addr %s1587, 8
          %s1589 = scalar_lea.vmem [#allocation8], %s1588
          %1590 = dma.done %s1586, 128
        $region96: #{tpu_custom_call.1} parent=91 // pred_fallthru
          _
      $region92: #{tpu_custom_call.1} parent=5 // pred_fallthru
        _
    $region6: #{tpu_custom_call.1} parent=1 // loop_footer
      %s30 = sadd.s32 1, %s26
    $region7: #{tpu_custom_call.1} parent=1 // loop_footer_branch
      %25 = sbr.rel target = $region3
    $region8: #{tpu_custom_call.1} parent=1 // loop_exit
      _
    %1591 = vsyncpa [#allocation3], 1
    %s1592 = scalar_lea.sflag [#allocation3], 1
    %1593 = vsyncpa %s1592, 1
    %1594 = vsyncpa [#allocation6], 1
    %1595 = vsyncpa [#allocation4], 1
    %s1596 = scalar_lea.sflag [#allocation4], 1
    %1597 = vsyncpa %s1596, 1

</llo_original>
